<compile_context>
chip_gen: v7x
topology: tpu7x:2x2x1
jax: 0.10.0
libtpu: 0.0.40
codegen_flags: <defaults>
</compile_context>

<pallas_src>
import jax
import jax.numpy as jnp
from jax.experimental import pallas as pl
from jax.experimental.pallas import tpu as pltpu

LANE = 128  # TPU vreg lane width


def _round_up(n, m):
    return ((n + m - 1) // m) * m


def _mlp_kernel(x_ref,
                w1_ref, b1_ref,
                w2_ref, b2_ref,
                w3_ref, b3_ref,
                w4_ref, b4_ref,
                w5_ref, b5_ref,
                out_ref):
    """Fused 5-layer MLP forward: 4x (Linear -> ReLU) + reduction head -> (tb, 1)."""
    cdt = w2_ref.dtype              # compute dtype for the hidden-layer matmuls

    # Layer 1 stays f32: K = features is tiny, and raw housing-style features
    # (unnormalized magnitudes) would lose precision in bf16.
    x = x_ref[...]
    h = jnp.dot(x, w1_ref[...], preferred_element_type=jnp.float32) + b1_ref[...]
    h = jnp.maximum(h, 0.0)         # ReLU (dropout: identity in eval mode)

    # Hidden layers 2-4: cast activations in-kernel to the weight compute dtype
    # (bf16 on v6e/v7x); accumulation stays f32, bias add / ReLU stay f32.
    h = jnp.dot(h.astype(cdt), w2_ref[...],
                preferred_element_type=jnp.float32) + b2_ref[...]
    h = jnp.maximum(h, 0.0)

    h = jnp.dot(h.astype(cdt), w3_ref[...],
                preferred_element_type=jnp.float32) + b3_ref[...]
    h = jnp.maximum(h, 0.0)

    h = jnp.dot(h.astype(cdt), w4_ref[...],
                preferred_element_type=jnp.float32) + b4_ref[...]
    h = jnp.maximum(h, 0.0)

    # Head: single output unit as a lane reduction (VPU multiply + XLU reduce).
    # Padded lanes of h are exactly zero (zero weight/bias pads + ReLU), so the
    # reduction equals the unpadded dot.  Writes only 4 B/row back to HBM.
    out = jnp.sum(h * w5_ref[...], axis=-1, keepdims=True) + b5_ref[...]
    out_ref[...] = out.astype(out_ref.dtype)


def prepare_params(params, compute_dtype=jnp.float32):
    """One-time preprocessing (do NOT call per forward).

    Takes PyTorch-convention params {name: (W[out,in], b[out])} and returns
    lane-padded (in, out) weights / (1, out) biases plus the head stored as a
    (1, 128) row + (1, 1) scalar bias, ready for the kernel.
    """
    names = ("fc1", "fc2", "fc3", "fc4")
    flat = []
    prev_out_pad = None
    for i, name in enumerate(names):
        w, b = params[name]
        w = jnp.asarray(w, jnp.float32).T            # (in, out)
        b = jnp.asarray(b, jnp.float32)[None, :]     # (1, out)
        fan_in, fan_out = w.shape
        # Input rows of layer i must match the (padded) output width of i-1;
        # the very first layer sees the raw feature dim of x (unpadded).
        in_pad = fan_in if i == 0 else prev_out_pad
        out_pad = _round_up(fan_out, LANE)
        w = jnp.pad(w, ((0, in_pad - fan_in), (0, out_pad - fan_out)))
        b = jnp.pad(b, ((0, 0), (0, out_pad - fan_out)))
        # Layer 1 weights stay f32 (raw-feature path); hidden layers may be bf16.
        wdt = jnp.float32 if i == 0 else compute_dtype
        flat.append(w.astype(wdt))
        flat.append(b)                               # biases stay f32
        prev_out_pad = out_pad

    # Head: the single output column, laid out as a lane row for the in-kernel
    # reduction head (no 128-wide MXU pass, no padded output writeback).
    w5, b5 = params["output_layer"]
    w5 = jnp.asarray(w5, jnp.float32)                # (1, h3)
    w5_row = jnp.pad(w5, ((0, 0), (0, prev_out_pad - w5.shape[1])))  # (1, 128) f32
    b5 = jnp.asarray(b5, jnp.float32).reshape(1, 1)                  # (1, 1) f32
    flat.append(w5_row)
    flat.append(b5)

    return {
        "flat": tuple(flat),
        "compute_dtype": compute_dtype,
        "features": params["fc1"][0].shape[1],
    }


def net_forward(x, prepped, tile_b=512):
    """Forward pass.  x: (batch, features) f32.  Returns (batch, 1) f32."""
    batch, feat = x.shape
    assert feat == prepped["features"]
    flat = prepped["flat"]

    # Tile: multiple of 8 sublanes; capped at 2048 so aggressive sweeps still
    # fit v7x's 64 MiB VMEM; capped at ceil(batch/2) so the grid has >= 2 steps
    # whenever the batch allows (v7x 2-TC split + input prefetch overlap).
    tb = min(_round_up(tile_b, 8), 2048)
    tb = min(tb, max(8, _round_up(pl.cdiv(batch, 2), 8)))
    grid = (pl.cdiv(batch, tb),)   # ragged last tile handled by Pallas masking;
                                   # no padded HBM copy of x.

    # x streams over the batch grid; every weight/bias tile has a constant
    # index_map -> stays VMEM-resident for the whole call.
    in_specs = [pl.BlockSpec((tb, feat), lambda i: (i, 0))]
    for a in flat:
        in_specs.append(pl.BlockSpec(a.shape, lambda i: (0, 0)))

    flops = int(2 * batch * (feat * LANE + 3 * LANE * LANE) + 2 * batch * LANE)
    bytes_accessed = int(batch * (feat * 4 + 4)
                         + sum(int(a.size) * a.dtype.itemsize for a in flat))

    out = pl.pallas_call(
        _mlp_kernel,
        grid=grid,
        in_specs=in_specs,
        out_specs=pl.BlockSpec((tb, 1), lambda i: (i, 0)),
        out_shape=jax.ShapeDtypeStruct((batch, 1), jnp.float32),
        compiler_params=pltpu.CompilerParams(
            dimension_semantics=("parallel",)),
        cost_estimate=pl.CostEstimate(
            flops=flops, transcendentals=0, bytes_accessed=bytes_accessed),
    )(x, *flat)
    return out


def init_params(key, features, h1, h2, h3):
    """Deterministic init mirroring nn.Linear's U(-1/sqrt(fan_in), +1/sqrt(fan_in))."""
    dims = [(features, h1), (h1, h1), (h1, h2), (h2, h3), (h3, 1)]
    names = ("fc1", "fc2", "fc3", "fc4", "output_layer")
    params = {}
    for name, (fan_in, fan_out) in zip(names, dims):
        key, kw, kb = jax.random.split(key, 3)
        bound = 1.0 / (fan_in ** 0.5)
        w = jax.random.uniform(kw, (fan_out, fan_in), jnp.float32, -bound, bound)
        b = jax.random.uniform(kb, (fan_out,), jnp.float32, -bound, bound)
        params[name] = (w, b)
    return params


def reference_forward(x, params):
    """Plain-JAX reference of the PyTorch forward (eval mode)."""
    h = x
    for name in ("fc1", "fc2", "fc3", "fc4"):
        w, b = params[name]
        h = jnp.maximum(h @ w.T + b, 0.0)
    w, b = params["output_layer"]
    return h @ w.T + b


if __name__ == "__main__":
    # Small shapes consistent with the module: 13 input features, hidden layers
    # 32/16/8.  batch=200 with the default tile sizing gives tb=104 -> a 2-step
    # grid with a ragged last tile, exercising both the parallel split and the
    # masked partial-block path.
    features, h1, h2, h3 = 13, 32, 16, 8
    batch = 200

    key = jax.random.PRNGKey(0)
    key, kx = jax.random.split(key)
    x = jax.random.normal(kx, (batch, features), jnp.float32)
    params = init_params(key, features, h1, h2, h3)

    ref = reference_forward(x, params)

    # f32 path (exact vs reference; preferred default, especially on v5e).
    prepped_f32 = prepare_params(params, jnp.float32)
    out_f32 = jax.block_until_ready(net_forward(x, prepped_f32))
    assert out_f32.shape == (batch, 1), out_f32.shape
    assert jnp.allclose(out_f32, ref, atol=1e-4, rtol=1e-4), "f32 mismatch vs reference"

    # bf16 hidden-layer compute (MXU-native on v6e/v7x); layer 1 + head stay f32,
    # accumulation stays f32 -> loose tolerance only from bf16 hidden matmuls.
    prepped_bf16 = prepare_params(params, jnp.bfloat16)
    out_bf16 = jax.block_until_ready(net_forward(x, prepped_bf16))
    tol = 5e-2 * float(jnp.max(jnp.abs(ref))) + 1e-3
    assert out_bf16.shape == (batch, 1), out_bf16.shape
    assert jnp.allclose(out_bf16, ref, atol=tol), "bf16 mismatch vs reference"

    print("KERNEL_OK")
</pallas_src>

<mosaic_0001>
module attributes {stable_mosaic.version = 11 : i64} {
  func.func @_mlp_kernel(%arg0: i32, %arg1: memref<104x13xf32, #tpu.memory_space<vmem>>, %arg2: memref<13x128xf32, #tpu.memory_space<vmem>>, %arg3: memref<1x128xf32, #tpu.memory_space<vmem>>, %arg4: memref<128x128xf32, #tpu.memory_space<vmem>>, %arg5: memref<1x128xf32, #tpu.memory_space<vmem>>, %arg6: memref<128x128xf32, #tpu.memory_space<vmem>>, %arg7: memref<1x128xf32, #tpu.memory_space<vmem>>, %arg8: memref<128x128xf32, #tpu.memory_space<vmem>>, %arg9: memref<1x128xf32, #tpu.memory_space<vmem>>, %arg10: memref<1x128xf32, #tpu.memory_space<vmem>>, %arg11: memref<1x1xf32, #tpu.memory_space<vmem>>, %arg12: memref<104x1xf32, #tpu.memory_space<vmem>>) attributes {dimension_semantics = [#tpu.dimension_semantics<parallel>], iteration_bounds = array<i64: 2>, scalar_prefetch = 0 : i64, scratch_operands = 0 : i64, tpu.core_type = #tpu.core_type<tc>, window_params = [{transform_indices = @transform_0, window_bounds = array<i64: 104, 13>}, {pipeline_mode = #tpu.pipeline_mode<synchronous>, transform_indices = @transform_1, window_bounds = array<i64: 13, 128>}, {pipeline_mode = #tpu.pipeline_mode<synchronous>, transform_indices = @transform_2, window_bounds = array<i64: 1, 128>}, {pipeline_mode = #tpu.pipeline_mode<synchronous>, transform_indices = @transform_3, window_bounds = array<i64: 128, 128>}, {pipeline_mode = #tpu.pipeline_mode<synchronous>, transform_indices = @transform_4, window_bounds = array<i64: 1, 128>}, {pipeline_mode = #tpu.pipeline_mode<synchronous>, transform_indices = @transform_5, window_bounds = array<i64: 128, 128>}, {pipeline_mode = #tpu.pipeline_mode<synchronous>, transform_indices = @transform_6, window_bounds = array<i64: 1, 128>}, {pipeline_mode = #tpu.pipeline_mode<synchronous>, transform_indices = @transform_7, window_bounds = array<i64: 128, 128>}, {pipeline_mode = #tpu.pipeline_mode<synchronous>, transform_indices = @transform_8, window_bounds = array<i64: 1, 128>}, {pipeline_mode = #tpu.pipeline_mode<synchronous>, transform_indices = @transform_9, window_bounds = array<i64: 1, 128>}, {pipeline_mode = #tpu.pipeline_mode<synchronous>, transform_indices = @transform_10, window_bounds = array<i64: 1, 1>}, {transform_indices = @transform_11, window_bounds = array<i64: 104, 1>}]} {
    %c0 = arith.constant 0 : index
    %c0_0 = arith.constant 0 : index
    %0 = vector.load %arg1[%c0, %c0_0] : memref<104x13xf32, #tpu.memory_space<vmem>>, vector<104x13xf32>
    %c0_1 = arith.constant 0 : index
    %c0_2 = arith.constant 0 : index
    %1 = vector.load %arg2[%c0_1, %c0_2] : memref<13x128xf32, #tpu.memory_space<vmem>>, vector<13x128xf32>
    %cst = arith.constant dense<0.000000e+00> : vector<104x128xf32>
    %2 = tpu.matmul %0, %1, %cst {dimension_numbers = #tpu.dot_dimension_numbers<[1], [0], [0], [1], [0, 0, 1, 1], [], []>} : vector<104x13xf32>, vector<13x128xf32>, vector<104x128xf32> -> vector<104x128xf32>
    %c0_3 = arith.constant 0 : index
    %c0_4 = arith.constant 0 : index
    %3 = vector.load %arg3[%c0_3, %c0_4] : memref<1x128xf32, #tpu.memory_space<vmem>>, vector<1x128xf32>
    %4 = vector.broadcast %3 : vector<1x128xf32> to vector<104x128xf32>
    %5 = arith.addf %2, %4 : vector<104x128xf32>
    %cst_5 = arith.constant 0.000000e+00 : f32
    %6 = vector.broadcast %cst_5 : f32 to vector<104x128xf32>
    %7 = arith.maximumf %5, %6 : vector<104x128xf32>
    %c0_6 = arith.constant 0 : index
    %c0_7 = arith.constant 0 : index
    %8 = vector.load %arg4[%c0_6, %c0_7] : memref<128x128xf32, #tpu.memory_space<vmem>>, vector<128x128xf32>
    %cst_8 = arith.constant dense<0.000000e+00> : vector<104x128xf32>
    %9 = tpu.matmul %7, %8, %cst_8 {dimension_numbers = #tpu.dot_dimension_numbers<[1], [0], [0], [1], [0, 0, 1, 1], [], []>} : vector<104x128xf32>, vector<128x128xf32>, vector<104x128xf32> -> vector<104x128xf32>
    %c0_9 = arith.constant 0 : index
    %c0_10 = arith.constant 0 : index
    %10 = vector.load %arg5[%c0_9, %c0_10] : memref<1x128xf32, #tpu.memory_space<vmem>>, vector<1x128xf32>
    %11 = vector.broadcast %10 : vector<1x128xf32> to vector<104x128xf32>
    %12 = arith.addf %9, %11 : vector<104x128xf32>
    %cst_11 = arith.constant 0.000000e+00 : f32
    %13 = vector.broadcast %cst_11 : f32 to vector<104x128xf32>
    %14 = arith.maximumf %12, %13 : vector<104x128xf32>
    %c0_12 = arith.constant 0 : index
    %c0_13 = arith.constant 0 : index
    %15 = vector.load %arg6[%c0_12, %c0_13] : memref<128x128xf32, #tpu.memory_space<vmem>>, vector<128x128xf32>
    %cst_14 = arith.constant dense<0.000000e+00> : vector<104x128xf32>
    %16 = tpu.matmul %14, %15, %cst_14 {dimension_numbers = #tpu.dot_dimension_numbers<[1], [0], [0], [1], [0, 0, 1, 1], [], []>} : vector<104x128xf32>, vector<128x128xf32>, vector<104x128xf32> -> vector<104x128xf32>
    %c0_15 = arith.constant 0 : index
    %c0_16 = arith.constant 0 : index
    %17 = vector.load %arg7[%c0_15, %c0_16] : memref<1x128xf32, #tpu.memory_space<vmem>>, vector<1x128xf32>
    %18 = vector.broadcast %17 : vector<1x128xf32> to vector<104x128xf32>
    %19 = arith.addf %16, %18 : vector<104x128xf32>
    %cst_17 = arith.constant 0.000000e+00 : f32
    %20 = vector.broadcast %cst_17 : f32 to vector<104x128xf32>
    %21 = arith.maximumf %19, %20 : vector<104x128xf32>
    %c0_18 = arith.constant 0 : index
    %c0_19 = arith.constant 0 : index
    %22 = vector.load %arg8[%c0_18, %c0_19] : memref<128x128xf32, #tpu.memory_space<vmem>>, vector<128x128xf32>
    %cst_20 = arith.constant dense<0.000000e+00> : vector<104x128xf32>
    %23 = tpu.matmul %21, %22, %cst_20 {dimension_numbers = #tpu.dot_dimension_numbers<[1], [0], [0], [1], [0, 0, 1, 1], [], []>} : vector<104x128xf32>, vector<128x128xf32>, vector<104x128xf32> -> vector<104x128xf32>
    %c0_21 = arith.constant 0 : index
    %c0_22 = arith.constant 0 : index
    %24 = vector.load %arg9[%c0_21, %c0_22] : memref<1x128xf32, #tpu.memory_space<vmem>>, vector<1x128xf32>
    %25 = vector.broadcast %24 : vector<1x128xf32> to vector<104x128xf32>
    %26 = arith.addf %23, %25 : vector<104x128xf32>
    %cst_23 = arith.constant 0.000000e+00 : f32
    %27 = vector.broadcast %cst_23 : f32 to vector<104x128xf32>
    %28 = arith.maximumf %26, %27 : vector<104x128xf32>
    %c0_24 = arith.constant 0 : index
    %c0_25 = arith.constant 0 : index
    %29 = vector.load %arg10[%c0_24, %c0_25] : memref<1x128xf32, #tpu.memory_space<vmem>>, vector<1x128xf32>
    %30 = vector.broadcast %29 : vector<1x128xf32> to vector<104x128xf32>
    %31 = arith.mulf %28, %30 : vector<104x128xf32>
    %cst_26 = arith.constant dense<0.000000e+00> : vector<104xf32>
    %32 = vector.multi_reduction <add>, %31, %cst_26 [1] : vector<104x128xf32> to vector<104xf32>
    %33 = vector.shape_cast %32 : vector<104xf32> to vector<104x1xf32>
    %c0_27 = arith.constant 0 : index
    %c0_28 = arith.constant 0 : index
    %34 = vector.load %arg11[%c0_27, %c0_28] : memref<1x1xf32, #tpu.memory_space<vmem>>, vector<1x1xf32>
    %35 = vector.broadcast %34 : vector<1x1xf32> to vector<104x1xf32>
    %36 = arith.addf %33, %35 : vector<104x1xf32>
    %c0_29 = arith.constant 0 : index
    %c0_30 = arith.constant 0 : index
    %37 = vector.load %arg12[%c0_29, %c0_30] : memref<104x1xf32, #tpu.memory_space<vmem>>, vector<104x1xf32>
    tpu.vector_store %arg12[%c0_29, %c0_30], %36 {strides = array<i32>} : memref<104x1xf32, #tpu.memory_space<vmem>>, vector<104x1xf32>,
    return
  }
  func.func @transform_0(%arg0: i32) -> (i32, i32) {
    %c0_i32 = arith.constant 0 : i32
    %c0_i32_0 = arith.constant 0 : i32
    return %arg0, %c0_i32 : i32, i32
  }
  func.func @transform_1(%arg0: i32) -> (i32, i32) {
    %c0_i32 = arith.constant 0 : i32
    %c0_i32_0 = arith.constant 0 : i32
    %c0_i32_1 = arith.constant 0 : i32
    return %c0_i32, %c0_i32_0 : i32, i32
  }
  func.func @transform_2(%arg0: i32) -> (i32, i32) {
    %c0_i32 = arith.constant 0 : i32
    %c0_i32_0 = arith.constant 0 : i32
    %c0_i32_1 = arith.constant 0 : i32
    return %c0_i32, %c0_i32_0 : i32, i32
  }
  func.func @transform_3(%arg0: i32) -> (i32, i32) {
    %c0_i32 = arith.constant 0 : i32
    %c0_i32_0 = arith.constant 0 : i32
    %c0_i32_1 = arith.constant 0 : i32
    return %c0_i32, %c0_i32_0 : i32, i32
  }
  func.func @transform_4(%arg0: i32) -> (i32, i32) {
    %c0_i32 = arith.constant 0 : i32
    %c0_i32_0 = arith.constant 0 : i32
    %c0_i32_1 = arith.constant 0 : i32
    return %c0_i32, %c0_i32_0 : i32, i32
  }
  func.func @transform_5(%arg0: i32) -> (i32, i32) {
    %c0_i32 = arith.constant 0 : i32
    %c0_i32_0 = arith.constant 0 : i32
    %c0_i32_1 = arith.constant 0 : i32
    return %c0_i32, %c0_i32_0 : i32, i32
  }
  func.func @transform_6(%arg0: i32) -> (i32, i32) {
    %c0_i32 = arith.constant 0 : i32
    %c0_i32_0 = arith.constant 0 : i32
    %c0_i32_1 = arith.constant 0 : i32
    return %c0_i32, %c0_i32_0 : i32, i32
  }
  func.func @transform_7(%arg0: i32) -> (i32, i32) {
    %c0_i32 = arith.constant 0 : i32
    %c0_i32_0 = arith.constant 0 : i32
    %c0_i32_1 = arith.constant 0 : i32
    return %c0_i32, %c0_i32_0 : i32, i32
  }
  func.func @transform_8(%arg0: i32) -> (i32, i32) {
    %c0_i32 = arith.constant 0 : i32
    %c0_i32_0 = arith.constant 0 : i32
    %c0_i32_1 = arith.constant 0 : i32
    return %c0_i32, %c0_i32_0 : i32, i32
  }
  func.func @transform_9(%arg0: i32) -> (i32, i32) {
    %c0_i32 = arith.constant 0 : i32
    %c0_i32_0 = arith.constant 0 : i32
    %c0_i32_1 = arith.constant 0 : i32
    return %c0_i32, %c0_i32_0 : i32, i32
  }
  func.func @transform_10(%arg0: i32) -> (i32, i32) {
    %c0_i32 = arith.constant 0 : i32
    %c0_i32_0 = arith.constant 0 : i32
    %c0_i32_1 = arith.constant 0 : i32
    return %c0_i32, %c0_i32_0 : i32, i32
  }
  func.func @transform_11(%arg0: i32) -> (i32, i32) {
    %c0_i32 = arith.constant 0 : i32
    %c0_i32_0 = arith.constant 0 : i32
    return %arg0, %c0_i32 : i32, i32
  }
}

</mosaic_0001>

<llo_original>
// kernel: tpu_custom_call.1
$region0: #{tpu_custom_call.1}
  #allocation0 [shape = 'u32[]', space=smem, size = 0x4, offset = 0x4, fixed_abs, tag = 'smem constant byte address 0x4 - core index']
  #allocation1 [shape = 'u32[144,128]{1,0:T(1,128)}', space=vmem, size = 0x12000, scoped, tag = 'internal scratch']
  #allocation2 [shape = 'f32[1,1]{1,0:T(1,128)S(1)}', space=vmem, size = 0x200, scoped, tag = 'scoped memory for tpu_custom_call.1']
  %s0 = inlined_call_operand.vmem [shape: f32[200,13], index: 0, kind: input, shape index: {}]
  %s1 = inlined_call_operand.hbm [shape: f32[13,128], index: 1, kind: input, shape index: {}]
  %s2 = inlined_call_operand.vmem [shape: f32[1,128], index: 2, kind: input, shape index: {}]
  %s3 = inlined_call_operand.vmem [shape: f32[128,128], index: 3, kind: input, shape index: {}]
  %s4 = inlined_call_operand.vmem [shape: f32[1,128], index: 4, kind: input, shape index: {}]
  %s5 = inlined_call_operand.hbm [shape: f32[128,128], index: 5, kind: input, shape index: {}]
  %s6 = inlined_call_operand.hbm [shape: f32[1,128], index: 6, kind: input, shape index: {}]
  %s7 = inlined_call_operand.vmem [shape: f32[128,128], index: 7, kind: input, shape index: {}]
  %s8 = inlined_call_operand.vmem [shape: f32[1,128], index: 8, kind: input, shape index: {}]
  %s9 = inlined_call_operand.vmem [shape: f32[1,128], index: 9, kind: input, shape index: {}]
  %s10 = inlined_call_operand.<no memory space> [shape: f32[1,1], index: 10, kind: input, shape index: {}]
  %s11 = inlined_call_operand.vmem [shape: f32[200,1], index: 11, kind: output, shape index: {}]
  %s12 = sld [smem:[#allocation0]]
  $region137: #{tpu_custom_call.1} parent=0
    _
  %s14 = ssub.s32 1, %s12
  %s15 = scalar_select 0, %s14, %s12
  %v16 = vstv %s10
  %17 = vst [vmem:[#allocation2] sm:$0x1] %v16
  $region1: #{tpu_custom_call.1} parent=0
    #allocation3 [shape = 'u8[8192]{0}', space=vmem, size = 0x2000, scoped, tag = 'input window, operand 1, single buffered']
    #allocation4 [shape = 's32[2]{0}', space=sflag, size = 0x8, scoped, tag = 'scoped memory for tpu_custom_call.1']
    #allocation5 [shape = 'u8[65536]{0}', space=vmem, size = 0x10000, scoped, tag = 'input window, operand 5, single buffered']
    #allocation6 [shape = 's32[1]{0}', space=sflag, size = 0x4, scoped, tag = 'scoped memory for tpu_custom_call.1']
    #allocation7 [shape = 'u8[512]{0}', space=vmem, size = 0x400, scoped, tag = 'input window, operand 6, single buffered']
    #allocation8 [shape = 'u8[106496]{0}', space=vmem, size = 0x1a000, scoped, tag = 'output window, operand 0']
    %18 = vsyncpa [#allocation4], 0
    %19 = vsyncpa [#allocation6], 0
    loop: start=0, step=1, limit=4
    $region2: #{tpu_custom_call.1} parent=1 // loop_pre_header
      _
    $region3: #{tpu_custom_call.1} parent=1 // loop_header
      %s21 = sphi 0, %s25
      %p22 = scmp.ge.s32.totalorder %s21, 4
      %s31 = sphi 0, %s33
      %s34 = sphi 0, %s31
      %s35 = sphi 0, %s34
      %s51 = sphi 0, %s35
      %s55 = sphi 0, %s55
      %s57 = sphi 0, %s55
      %s58 = sphi 0, %s57
      %s72 = sphi 0, %s58
      %s76 = sphi 0, %s76
      %s78 = sphi 0, %s76
      %s79 = sphi 0, %s78
      %s93 = sphi 0, %s79
      %s97 = sphi 0, %s97
      %s99 = sphi 0, %s97
      %s100 = sphi 0, %s99
      %s114 = sphi 0, %s100
      %s118 = sphi 0, %s118
      %s120 = sphi 0, %s118
      %s121 = sphi 0, %s120
      %s135 = sphi 0, %s121
      %s139 = sphi 0, %s139
      %s141 = sphi 0, %s139
      %s142 = sphi 0, %s141
      %s156 = sphi 0, %s142
      %s160 = sphi 0, %s160
      %s162 = sphi 0, %s160
      %s163 = sphi 0, %s162
      %s177 = sphi 0, %s163
      %s181 = sphi 0, %s181
      %s183 = sphi 0, %s181
      %s184 = sphi 0, %s183
      %s198 = sphi 0, %s184
      %s202 = sphi 0, %s202
      %s204 = sphi 0, %s202
      %s205 = sphi 0, %s204
      %s219 = sphi 0, %s205
      %s223 = sphi 0, %s223
      %s225 = sphi 0, %s223
      %s226 = sphi 0, %s225
      %s240 = sphi 0, %s226
      %s244 = sphi 0, %s244
      %s246 = sphi 0, %s244
      %s247 = sphi 0, %s246
      %s261 = sphi 0, %s247
      %s267 = sphi 0, %s269
      %s270 = sphi 0, %s267
      %s271 = sphi 0, %s270
      %s287 = sphi 0, %s271
    $region4: #{tpu_custom_call.1} parent=1 // loop_header_branch
      %24 = sbr.rel (%p22) target = $region8
    $region5: #{tpu_custom_call.1} parent=1 // loop_body
      %s26 = ssub.s32 %s21, 1
      %s27 = ssub.s32 %s21, 2
      %s28 = sadd.s32 %s21, 1
      %s29 = ssub.s32 %s21, %s28
      %p30 = scmp.eq.s32.totalorder %s29, 0
      %s32 = sadd.s32 %s31, 1
      %s33 = scalar_select %p30, %s31, %s32
      %p36 = pneg %p30
      %p37 = scmp.eq.s32.totalorder %s21, 1
      %p38 = por %p36, %p37
      %p39 = scmp.ne.s32.totalorder %s31, %s34
      %p40 = scmp.eq.s32.totalorder %s21, 0
      %p41 = por %p39, %p40
      %p42 = scmp.ne.s32.totalorder %s31, %s34
      %p43 = scmp.eq.s32.totalorder %s26, 1
      %p44 = por %p42, %p43
      %p45 = scmp.ne.s32.totalorder %s34, %s35
      %p46 = scmp.eq.s32.totalorder %s26, 0
      %p47 = por %p45, %p46
      %p48 = scmp.ne.s32.totalorder %s34, %s35
      %p49 = scmp.eq.s32.totalorder %s27, 1
      %p50 = por %p48, %p49
      %p52 = scmp.ne.s32.totalorder %s35, %s51
      %p53 = scmp.eq.s32.totalorder %s27, 0
      %p54 = por %p52, %p53
      %s56 = sadd.s32 %s55, 1
      %p59 = scmp.eq.s32.totalorder %s21, 1
      %p60 = scmp.ne.s32.totalorder %s55, %s57
      %p61 = scmp.eq.s32.totalorder %s21, 0
      %p62 = por %p60, %p61
      %p63 = scmp.ne.s32.totalorder %s55, %s57
      %p64 = scmp.eq.s32.totalorder %s26, 1
      %p65 = por %p63, %p64
      %p66 = scmp.ne.s32.totalorder %s57, %s58
      %p67 = scmp.eq.s32.totalorder %s26, 0
      %p68 = por %p66, %p67
      %p69 = scmp.ne.s32.totalorder %s57, %s58
      %p70 = scmp.eq.s32.totalorder %s27, 1
      %p71 = por %p69, %p70
      %p73 = scmp.ne.s32.totalorder %s58, %s72
      %p74 = scmp.eq.s32.totalorder %s27, 0
      %p75 = por %p73, %p74
      %s77 = sadd.s32 %s76, 1
      %p80 = scmp.eq.s32.totalorder %s21, 1
      %p81 = scmp.ne.s32.totalorder %s76, %s78
      %p82 = scmp.eq.s32.totalorder %s21, 0
      %p83 = por %p81, %p82
      %p84 = scmp.ne.s32.totalorder %s76, %s78
      %p85 = scmp.eq.s32.totalorder %s26, 1
      %p86 = por %p84, %p85
      %p87 = scmp.ne.s32.totalorder %s78, %s79
      %p88 = scmp.eq.s32.totalorder %s26, 0
      %p89 = por %p87, %p88
      %p90 = scmp.ne.s32.totalorder %s78, %s79
      %p91 = scmp.eq.s32.totalorder %s27, 1
      %p92 = por %p90, %p91
      %p94 = scmp.ne.s32.totalorder %s79, %s93
      %p95 = scmp.eq.s32.totalorder %s27, 0
      %p96 = por %p94, %p95
      %s98 = sadd.s32 %s97, 1
      %p101 = scmp.eq.s32.totalorder %s21, 1
      %p102 = scmp.ne.s32.totalorder %s97, %s99
      %p103 = scmp.eq.s32.totalorder %s21, 0
      %p104 = por %p102, %p103
      %p105 = scmp.ne.s32.totalorder %s97, %s99
      %p106 = scmp.eq.s32.totalorder %s26, 1
      %p107 = por %p105, %p106
      %p108 = scmp.ne.s32.totalorder %s99, %s100
      %p109 = scmp.eq.s32.totalorder %s26, 0
      %p110 = por %p108, %p109
      %p111 = scmp.ne.s32.totalorder %s99, %s100
      %p112 = scmp.eq.s32.totalorder %s27, 1
      %p113 = por %p111, %p112
      %p115 = scmp.ne.s32.totalorder %s100, %s114
      %p116 = scmp.eq.s32.totalorder %s27, 0
      %p117 = por %p115, %p116
      %s119 = sadd.s32 %s118, 1
      %p122 = scmp.eq.s32.totalorder %s21, 1
      %p123 = scmp.ne.s32.totalorder %s118, %s120
      %p124 = scmp.eq.s32.totalorder %s21, 0
      %p125 = por %p123, %p124
      %p126 = scmp.ne.s32.totalorder %s118, %s120
      %p127 = scmp.eq.s32.totalorder %s26, 1
      %p128 = por %p126, %p127
      %p129 = scmp.ne.s32.totalorder %s120, %s121
      %p130 = scmp.eq.s32.totalorder %s26, 0
      %p131 = por %p129, %p130
      %p132 = scmp.ne.s32.totalorder %s120, %s121
      %p133 = scmp.eq.s32.totalorder %s27, 1
      %p134 = por %p132, %p133
      %p136 = scmp.ne.s32.totalorder %s121, %s135
      %p137 = scmp.eq.s32.totalorder %s27, 0
      %p138 = por %p136, %p137
      %s140 = sadd.s32 %s139, 1
      %p143 = scmp.eq.s32.totalorder %s21, 1
      %p144 = scmp.ne.s32.totalorder %s139, %s141
      %p145 = scmp.eq.s32.totalorder %s21, 0
      %p146 = por %p144, %p145
      %p147 = scmp.ne.s32.totalorder %s139, %s141
      %p148 = scmp.eq.s32.totalorder %s26, 1
      %p149 = por %p147, %p148
      %p150 = scmp.ne.s32.totalorder %s141, %s142
      %p151 = scmp.eq.s32.totalorder %s26, 0
      %p152 = por %p150, %p151
      %p153 = scmp.ne.s32.totalorder %s141, %s142
      %p154 = scmp.eq.s32.totalorder %s27, 1
      %p155 = por %p153, %p154
      %p157 = scmp.ne.s32.totalorder %s142, %s156
      %p158 = scmp.eq.s32.totalorder %s27, 0
      %p159 = por %p157, %p158
      %s161 = sadd.s32 %s160, 1
      %p164 = scmp.eq.s32.totalorder %s21, 1
      %p165 = scmp.ne.s32.totalorder %s160, %s162
      %p166 = scmp.eq.s32.totalorder %s21, 0
      %p167 = por %p165, %p166
      %p168 = scmp.ne.s32.totalorder %s160, %s162
      %p169 = scmp.eq.s32.totalorder %s26, 1
      %p170 = por %p168, %p169
      %p171 = scmp.ne.s32.totalorder %s162, %s163
      %p172 = scmp.eq.s32.totalorder %s26, 0
      %p173 = por %p171, %p172
      %p174 = scmp.ne.s32.totalorder %s162, %s163
      %p175 = scmp.eq.s32.totalorder %s27, 1
      %p176 = por %p174, %p175
      %p178 = scmp.ne.s32.totalorder %s163, %s177
      %p179 = scmp.eq.s32.totalorder %s27, 0
      %p180 = por %p178, %p179
      %s182 = sadd.s32 %s181, 1
      %p185 = scmp.eq.s32.totalorder %s21, 1
      %p186 = scmp.ne.s32.totalorder %s181, %s183
      %p187 = scmp.eq.s32.totalorder %s21, 0
      %p188 = por %p186, %p187
      %p189 = scmp.ne.s32.totalorder %s181, %s183
      %p190 = scmp.eq.s32.totalorder %s26, 1
      %p191 = por %p189, %p190
      %p192 = scmp.ne.s32.totalorder %s183, %s184
      %p193 = scmp.eq.s32.totalorder %s26, 0
      %p194 = por %p192, %p193
      %p195 = scmp.ne.s32.totalorder %s183, %s184
      %p196 = scmp.eq.s32.totalorder %s27, 1
      %p197 = por %p195, %p196
      %p199 = scmp.ne.s32.totalorder %s184, %s198
      %p200 = scmp.eq.s32.totalorder %s27, 0
      %p201 = por %p199, %p200
      %s203 = sadd.s32 %s202, 1
      %p206 = scmp.eq.s32.totalorder %s21, 1
      %p207 = scmp.ne.s32.totalorder %s202, %s204
      %p208 = scmp.eq.s32.totalorder %s21, 0
      %p209 = por %p207, %p208
      %p210 = scmp.ne.s32.totalorder %s202, %s204
      %p211 = scmp.eq.s32.totalorder %s26, 1
      %p212 = por %p210, %p211
      %p213 = scmp.ne.s32.totalorder %s204, %s205
      %p214 = scmp.eq.s32.totalorder %s26, 0
      %p215 = por %p213, %p214
      %p216 = scmp.ne.s32.totalorder %s204, %s205
      %p217 = scmp.eq.s32.totalorder %s27, 1
      %p218 = por %p216, %p217
      %p220 = scmp.ne.s32.totalorder %s205, %s219
      %p221 = scmp.eq.s32.totalorder %s27, 0
      %p222 = por %p220, %p221
      %s224 = sadd.s32 %s223, 1
      %p227 = scmp.eq.s32.totalorder %s21, 1
      %p228 = scmp.ne.s32.totalorder %s223, %s225
      %p229 = scmp.eq.s32.totalorder %s21, 0
      %p230 = por %p228, %p229
      %p231 = scmp.ne.s32.totalorder %s223, %s225
      %p232 = scmp.eq.s32.totalorder %s26, 1
      %p233 = por %p231, %p232
      %p234 = scmp.ne.s32.totalorder %s225, %s226
      %p235 = scmp.eq.s32.totalorder %s26, 0
      %p236 = por %p234, %p235
      %p237 = scmp.ne.s32.totalorder %s225, %s226
      %p238 = scmp.eq.s32.totalorder %s27, 1
      %p239 = por %p237, %p238
      %p241 = scmp.ne.s32.totalorder %s226, %s240
      %p242 = scmp.eq.s32.totalorder %s27, 0
      %p243 = por %p241, %p242
      %s245 = sadd.s32 %s244, 1
      %p248 = scmp.eq.s32.totalorder %s21, 1
      %p249 = scmp.ne.s32.totalorder %s244, %s246
      %p250 = scmp.eq.s32.totalorder %s21, 0
      %p251 = por %p249, %p250
      %p252 = scmp.ne.s32.totalorder %s244, %s246
      %p253 = scmp.eq.s32.totalorder %s26, 1
      %p254 = por %p252, %p253
      %p255 = scmp.ne.s32.totalorder %s246, %s247
      %p256 = scmp.eq.s32.totalorder %s26, 0
      %p257 = por %p255, %p256
      %p258 = scmp.ne.s32.totalorder %s246, %s247
      %p259 = scmp.eq.s32.totalorder %s27, 1
      %p260 = por %p258, %p259
      %p262 = scmp.ne.s32.totalorder %s247, %s261
      %p263 = scmp.eq.s32.totalorder %s27, 0
      %p264 = por %p262, %p263
      %s265 = ssub.s32 %s21, %s28
      %p266 = scmp.eq.s32.totalorder %s265, 0
      %s268 = sadd.s32 %s267, 1
      %s269 = scalar_select %p266, %s267, %s268
      %p272 = pneg %p266
      %p273 = scmp.eq.s32.totalorder %s21, 1
      %p274 = por %p272, %p273
      %p275 = scmp.ne.s32.totalorder %s267, %s270
      %p276 = scmp.eq.s32.totalorder %s21, 0
      %p277 = por %p275, %p276
      %p278 = scmp.ne.s32.totalorder %s267, %s270
      %p279 = scmp.eq.s32.totalorder %s26, 1
      %p280 = por %p278, %p279
      %p281 = scmp.ne.s32.totalorder %s270, %s271
      %p282 = scmp.eq.s32.totalorder %s26, 0
      %p283 = por %p281, %p282
      %p284 = scmp.ne.s32.totalorder %s270, %s271
      %p285 = scmp.eq.s32.totalorder %s27, 1
      %p286 = por %p284, %p285
      %p288 = scmp.ne.s32.totalorder %s271, %s287
      %p289 = scmp.eq.s32.totalorder %s27, 0
      %p290 = por %p288, %p289
      %p291 = scmp.le.s32.totalorder 1, %s21
      %p292 = scmp.lt.s32.totalorder %s21, 3
      %p293 = pnand %p291, %p292
      %p294 = pneg %p293
      // Predicated region
      $region9: #{tpu_custom_call.1} parent=5 // pred_check
        _
      $region10: #{tpu_custom_call.1} parent=5 // pred_check_branch
        %296 = sbr.rel (%p293) target = $region12
      $region11: #{tpu_custom_call.1} parent=5 // pred_region
        %s297 = ssub.s32 %s21, 1
        // Predicated region
        $region13: #{tpu_custom_call.1} parent=11 // pred_check
          %p298 = pneg %p68
        $region14: #{tpu_custom_call.1} parent=11 // pred_check_branch
          %300 = sbr.rel (%p298) target = $region16
        $region15: #{tpu_custom_call.1} parent=11 // pred_region
          %s302 = ssub.s32 256, 256
          %303 = vsyncadd [#allocation4], %s302
          %s304 = sshll.u32 [#allocation3], 4
          %s305 = int_to_ptr.vmem [resolvable:$true] %s304
          %310 = dma.hbm_to_vmem [thread:$0]  %s1, 256, %s305, [#allocation4], 128, 128, 8
        $region16: #{tpu_custom_call.1} parent=11 // pred_fallthru
          _
        // Predicated region
        $region17: #{tpu_custom_call.1} parent=11 // pred_check
          %p311 = pneg %p89
        $region18: #{tpu_custom_call.1} parent=11 // pred_check_branch
          %313 = sbr.rel (%p311) target = $region20
        $region19: #{tpu_custom_call.1} parent=11 // pred_region
          _
        $region20: #{tpu_custom_call.1} parent=11 // pred_fallthru
          _
        // Predicated region
        $region21: #{tpu_custom_call.1} parent=11 // pred_check
          %p314 = pneg %p110
        $region22: #{tpu_custom_call.1} parent=11 // pred_check_branch
          %316 = sbr.rel (%p314) target = $region24
        $region23: #{tpu_custom_call.1} parent=11 // pred_region
          _
        $region24: #{tpu_custom_call.1} parent=11 // pred_fallthru
          _
        // Predicated region
        $region25: #{tpu_custom_call.1} parent=11 // pred_check
          %p317 = pneg %p131
        $region26: #{tpu_custom_call.1} parent=11 // pred_check_branch
          %319 = sbr.rel (%p317) target = $region28
        $region27: #{tpu_custom_call.1} parent=11 // pred_region
          _
        $region28: #{tpu_custom_call.1} parent=11 // pred_fallthru
          _
        // Predicated region
        $region29: #{tpu_custom_call.1} parent=11 // pred_check
          %p320 = pneg %p152
        $region30: #{tpu_custom_call.1} parent=11 // pred_check_branch
          %322 = sbr.rel (%p320) target = $region32
        $region31: #{tpu_custom_call.1} parent=11 // pred_region
          %s324 = ssub.s32 2048, 2048
          %325 = vsyncadd [#allocation6], %s324
          %s326 = sshll.u32 [#allocation5], 4
          %s327 = int_to_ptr.vmem [resolvable:$true] %s326
          %332 = dma.hbm_to_vmem [thread:$0]  %s5, 2048, %s327, [#allocation6], 128, 128, 8
        $region32: #{tpu_custom_call.1} parent=11 // pred_fallthru
          _
        // Predicated region
        $region33: #{tpu_custom_call.1} parent=11 // pred_check
          %p333 = pneg %p173
        $region34: #{tpu_custom_call.1} parent=11 // pred_check_branch
          %335 = sbr.rel (%p333) target = $region36
        $region35: #{tpu_custom_call.1} parent=11 // pred_region
          %s337 = ssub.s32 16, 16
          %338 = vsyncadd [#allocation6], %s337
          %s340 = sshll.u32 [#allocation7], 4
          %s341 = int_to_ptr.vmem [resolvable:$true] %s340
          %343 = dma.hbm_to_vmem [thread:$0]  %s6, 16, %s341, [#allocation6]
        $region36: #{tpu_custom_call.1} parent=11 // pred_fallthru
          _
        // Predicated region
        $region37: #{tpu_custom_call.1} parent=11 // pred_check
          %p344 = pneg %p194
        $region38: #{tpu_custom_call.1} parent=11 // pred_check_branch
          %346 = sbr.rel (%p344) target = $region40
        $region39: #{tpu_custom_call.1} parent=11 // pred_region
          _
        $region40: #{tpu_custom_call.1} parent=11 // pred_fallthru
          _
        // Predicated region
        $region41: #{tpu_custom_call.1} parent=11 // pred_check
          %p347 = pneg %p215
        $region42: #{tpu_custom_call.1} parent=11 // pred_check_branch
          %349 = sbr.rel (%p347) target = $region44
        $region43: #{tpu_custom_call.1} parent=11 // pred_region
          _
        $region44: #{tpu_custom_call.1} parent=11 // pred_fallthru
          _
        // Predicated region
        $region45: #{tpu_custom_call.1} parent=11 // pred_check
          %p350 = pneg %p236
        $region46: #{tpu_custom_call.1} parent=11 // pred_check_branch
          %352 = sbr.rel (%p350) target = $region48
        $region47: #{tpu_custom_call.1} parent=11 // pred_region
          _
        $region48: #{tpu_custom_call.1} parent=11 // pred_fallthru
          _
        // Predicated region
        $region49: #{tpu_custom_call.1} parent=11 // pred_check
          %p353 = pneg %p257
        $region50: #{tpu_custom_call.1} parent=11 // pred_check_branch
          %355 = sbr.rel (%p353) target = $region52
        $region51: #{tpu_custom_call.1} parent=11 // pred_region
          _
        $region52: #{tpu_custom_call.1} parent=11 // pred_fallthru
          _
      $region12: #{tpu_custom_call.1} parent=5 // pred_fallthru
        _
      %p356 = scmp.lt.s32.totalorder %s21, 2
      // Predicated region
      $region53: #{tpu_custom_call.1} parent=5 // pred_check
        %p357 = pneg %p356
      $region54: #{tpu_custom_call.1} parent=5 // pred_check_branch
        %359 = sbr.rel (%p357) target = $region56
      $region55: #{tpu_custom_call.1} parent=5 // pred_region
        // Predicated region
        $region57: #{tpu_custom_call.1} parent=55 // pred_check
          %p360 = pneg %p41
        $region58: #{tpu_custom_call.1} parent=55 // pred_check_branch
          %362 = sbr.rel (%p360) target = $region60
        $region59: #{tpu_custom_call.1} parent=55 // pred_region
          %s363 = smul.u32 13, %s21
          %s364 = ssub.s32 25, %s363
          %p365 = scmp.lt.s32.totalorder %s364, 13
          %s366 = scalar_select %p365, %s364, 13
          %s367 = smul.u32 128, %s366
          %p368 = scmp.lt.s32.totalorder %s363, 24
          %s369 = scalar_select %p368, %s363, 24
          %s370 = smul.addr %s369, 8
          %s371 = scalar_lea.vmem %s0, %s370
          %s372 = smul.u32 13, %s21
          %s373 = ssub.s32 25, %s372
          %p374 = scmp.lt.s32.totalorder %s373, 13
          %s375 = scalar_select %p374, %s373, 13
          %s376 = smul.u32 128, %s375
        $region60: #{tpu_custom_call.1} parent=55 // pred_fallthru
          _
      $region56: #{tpu_custom_call.1} parent=5 // pred_fallthru
        _
      %p377 = scmp.le.s32.totalorder 1, %s21
      %p378 = scmp.lt.s32.totalorder %s21, 3
      %p379 = pnand %p377, %p378
      %p380 = pneg %p379
      // Predicated region
      $region61: #{tpu_custom_call.1} parent=5 // pred_check
        _
      $region62: #{tpu_custom_call.1} parent=5 // pred_check_branch
        %382 = sbr.rel (%p379) target = $region64
      $region63: #{tpu_custom_call.1} parent=5 // pred_region
        %s383 = ssub.s32 %s21, 1
        // Predicated region
        $region65: #{tpu_custom_call.1} parent=63 // pred_check
          %p384 = pneg %p68
        $region66: #{tpu_custom_call.1} parent=63 // pred_check_branch
          %386 = sbr.rel (%p384) target = $region68
        $region67: #{tpu_custom_call.1} parent=63 // pred_region
          %387 = dma.done [#allocation4], 256
        $region68: #{tpu_custom_call.1} parent=63 // pred_fallthru
          _
        // Predicated region
        $region69: #{tpu_custom_call.1} parent=63 // pred_check
          %p388 = pneg %p152
        $region70: #{tpu_custom_call.1} parent=63 // pred_check_branch
          %390 = sbr.rel (%p388) target = $region72
        $region71: #{tpu_custom_call.1} parent=63 // pred_region
          %391 = dma.done [#allocation6], 2048
        $region72: #{tpu_custom_call.1} parent=63 // pred_fallthru
          _
        // Predicated region
        $region73: #{tpu_custom_call.1} parent=63 // pred_check
          %p392 = pneg %p173
        $region74: #{tpu_custom_call.1} parent=63 // pred_check_branch
          %394 = sbr.rel (%p392) target = $region76
        $region75: #{tpu_custom_call.1} parent=63 // pred_region
          %395 = dma.done [#allocation6], 16
        $region76: #{tpu_custom_call.1} parent=63 // pred_fallthru
          _
        %s396 = smul.u32 13, %s26
        %s397 = ssub.s32 25, %s396
        %p398 = scmp.lt.s32.totalorder %s397, 13
        %s399 = scalar_select %p398, %s397, 13
        %s400 = smul.u32 128, %s399
        %p401 = scmp.lt.s32.totalorder %s396, 24
        %s402 = scalar_select %p401, %s396, 24
        %s403 = smul.addr %s402, 8
        %s404 = scalar_lea.vmem %s0, %s403
        %p405 = pneg %p47
        %p406 = pneg %p44
        %p407 = pneg %p68
        %p408 = pneg %p65
        %p409 = pneg %p89
        %p410 = pneg %p86
        %p411 = pneg %p110
        %p412 = pneg %p107
        %p413 = pneg %p131
        %p414 = pneg %p128
        %p415 = pneg %p152
        %p416 = pneg %p149
        %p417 = pneg %p173
        %p418 = pneg %p170
        %p419 = pneg %p194
        %p420 = pneg %p191
        %p421 = pneg %p215
        %p422 = pneg %p212
        %p423 = pneg %p236
        %p424 = pneg %p233
        %p425 = pneg %p257
        %p426 = pneg %p254
        %p427 = pneg %p283
        %p428 = pneg %p280
        %s429 = sand.u32 %s270, 1
        %s430 = sand.u32 %s270, 1
        %s431 = smul.addr %s430, 104
        %s432 = scalar_lea.vmem [#allocation8], %s431
        %s433 = smul.u32 13, %s26
        %s434 = ssub.s32 25, %s433
        %p435 = scmp.lt.s32.totalorder %s434, 13
        %s436 = scalar_select %p435, %s434, 13
        %s437 = smul.u32 128, %s436
        %p438 = scmp.lt.s32.totalorder %s433, 24
        %s439 = scalar_select %p438, %s433, 24
        %s440 = smul.addr %s439, 8
        %s441 = scalar_lea.vmem %s0, %s440
        %s442 = smul.u32 13, %s26
        %s443 = ssub.s32 25, %s442
        %p444 = scmp.lt.s32.totalorder %s443, 13
        %s445 = scalar_select %p444, %s443, 13
        %s446 = smul.u32 128, %s445
        %s447 = smul.u32 13, %s26
        %s448 = ssub.s32 25, %s447
        %p449 = scmp.lt.s32.totalorder %s448, 13
        %s450 = scalar_select %p449, %s448, 13
        %s451 = smul.u32 128, %s450
        %v452 = vld [vmem:[%s441] sm:$0xff]
        %v453 = vld [vmem:[%s441 + $0x8] sm:$0xff]
        %v454 = vld [vmem:[%s441 + $0x10] sm:$0xff]
        %v455 = vld [vmem:[%s441 + $0x18] sm:$0xff]
        %v456 = vld [vmem:[%s441 + $0x20] sm:$0xff]
        %v457 = vld [vmem:[%s441 + $0x28] sm:$0xff]
        %v458 = vld [vmem:[%s441 + $0x30] sm:$0xff]
        %v459 = vld [vmem:[%s441 + $0x38] sm:$0xff]
        %v460 = vld [vmem:[%s441 + $0x40] sm:$0xff]
        %v461 = vld [vmem:[%s441 + $0x48] sm:$0xff]
        %v462 = vld [vmem:[%s441 + $0x50] sm:$0xff]
        %v463 = vld [vmem:[%s441 + $0x58] sm:$0xff]
        %v464 = vld [vmem:[%s441 + $0x60] sm:$0xff]
        %v465 = vld [vmem:[#allocation3] sm:$0xff]
        %v466 = vld [vmem:[#allocation3 + $0x8] sm:$0x1f]
        %v467 = vld [vmem:[%s2] sm:$0x1]
        %v469 = vlaneseq
        %v470 = vshrl.u32 %v469, 7
        %v471 = vsub.s32 0, %v470
        %v472 = vrot.slane %v467, %v471
        %vm474 = vcmask 105472
        %v476 = vsel %vm474, %v452, 0
        %v479 = vsel %vm474, %v453, 0
        %v482 = vsel %vm474, %v454, 0
        %v485 = vsel %vm474, %v455, 0
        %v488 = vsel %vm474, %v456, 0
        %v491 = vsel %vm474, %v457, 0
        %v494 = vsel %vm474, %v458, 0
        %v497 = vsel %vm474, %v459, 0
        %v500 = vsel %vm474, %v460, 0
        %v503 = vsel %vm474, %v461, 0
        %v506 = vsel %vm474, %v462, 0
        %v509 = vsel %vm474, %v463, 0
        %v512 = vsel %vm474, %v464, 0
        %vm514 = vcmask 1044480
        %v516 = vsel %vm514, %v466, 0
        %518 = vmatprep.subr.mxu0 0.0
        %519 = vmatpush1.msra.mxu0 %v465
        %520 = vmatprep.subr.mxu0 0.0
        %521 = vmatpush1.msra.mxu0 %v516
        %522 = vmatprep.subr.mxu0 0.0
        %523 = vmatpush1.msra.mxu0 0.0
        %524 = vmatprep.subr.mxu0 0.0
        %525 = vmatpush1.msra.mxu0 0.0
        %526 = vmatprep.subr.mxu0 0.0
        %527 = vmatpush1.msra.mxu0 0.0
        %528 = vmatprep.subr.mxu0 0.0
        %529 = vmatpush1.msra.mxu0 0.0
        %530 = vmatprep.subr.mxu0 0.0
        %531 = vmatpush1.msra.mxu0 0.0
        %532 = vmatprep.subr.mxu0 0.0
        %533 = vmatpush1.msra.mxu0 0.0
        %534 = vmatprep.subr.mxu0 0.0
        %535 = vmatpush1.msra.mxu0 0.0
        %536 = vmatprep.subr.mxu0 0.0
        %537 = vmatpush1.msra.mxu0 0.0
        %538 = vmatprep.subr.mxu0 0.0
        %539 = vmatpush1.msra.mxu0 0.0
        %540 = vmatprep.subr.mxu0 0.0
        %541 = vmatpush1.msra.mxu0 0.0
        %542 = vmatprep.subr.mxu0 0.0
        %543 = vmatpush1.msra.mxu0 0.0
        %544 = vmatprep.subr.mxu0 0.0
        %545 = vmatpush1.msra.mxu0 0.0
        %546 = vmatprep.subr.mxu0 0.0
        %547 = vmatpush1.msra.mxu0 0.0
        %548 = vmatprep.subr.mxu0 0.0
        %549 = vmatpush1.msra.mxu0 0.0
        %550 = vmatprep.subr.mxu0 0.0
        %551 = vmatpush1.msra.mxu0 0.0
        %552 = vmatprep.subr.mxu0 0.0
        %553 = vmatpush1.msra.mxu0 0.0
        %554 = vmatprep.subr.mxu0 0.0
        %555 = vmatpush1.msra.mxu0 0.0
        %556 = vmatprep.subr.mxu0 0.0
        %557 = vmatpush1.msra.mxu0 0.0
        %558 = vmatprep.subr.mxu0 0.0
        %559 = vmatpush1.msra.mxu0 0.0
        %560 = vmatprep.subr.mxu0 0.0
        %561 = vmatpush1.msra.mxu0 0.0
        %562 = vmatprep.subr.mxu0 0.0
        %563 = vmatpush1.msra.mxu0 0.0
        %564 = vmatprep.subr.mxu0 0.0
        %565 = vmatpush1.msra.mxu0 0.0
        %566 = vmatprep.subr.mxu0 0.0
        %567 = vmatpush1.msra.mxu0 0.0
        %568 = vmatprep.subr.mxu0 0.0
        %569 = vmatpush1.msra.mxu0 0.0
        %570 = vmatprep.subr.mxu0 0.0
        %571 = vmatpush1.msra.mxu0 0.0
        %572 = vmatprep.subr.mxu0 0.0
        %573 = vmatpush1.msra.mxu0 0.0
        %574 = vmatprep.subr.mxu0 0.0
        %575 = vmatpush1.msra.mxu0 0.0
        %576 = vmatprep.subr.mxu0 0.0
        %577 = vmatpush1.msra.mxu0 0.0
        %578 = vmatprep.subr.mxu0 0.0
        %579 = vmatpush1.msra.mxu0 0.0
        %580 = vmatprep.subr.mxu0 0.0
        %581 = vmatpush1.msra.mxu0 0.0
        %582 = vmatprep.mubr.f32.mxu0 0.0
        %583 = vmatmul.mubr.f32.gmra.mrb[0].mxu0 %v476
        %v584 = vpop.f32.mrb[0].mxu0
        %v585 = vadd.f32 %v472, %v584
        %v586 = vpop.f32.mrb[0].mxu0
        %587 = vmatprep.mubr.f32.mxu0 0.0
        %588 = vmatmul.mubr.f32.gmra.mrb[0].mxu0 %v479
        %v589 = vpop.f32.mrb[0].mxu0
        %v590 = vadd.f32 %v472, %v589
        %v591 = vpop.f32.mrb[0].mxu0
        %592 = vmatprep.mubr.f32.mxu0 0.0
        %593 = vmatmul.mubr.f32.gmra.mrb[0].mxu0 %v482
        %v594 = vpop.f32.mrb[0].mxu0
        %v595 = vadd.f32 %v472, %v594
        %v596 = vpop.f32.mrb[0].mxu0
        %597 = vmatprep.mubr.f32.mxu0 0.0
        %598 = vmatmul.mubr.f32.gmra.mrb[0].mxu0 %v485
        %v599 = vpop.f32.mrb[0].mxu0
        %v600 = vadd.f32 %v472, %v599
        %v601 = vpop.f32.mrb[0].mxu0
        %602 = vmatprep.mubr.f32.mxu0 0.0
        %603 = vmatmul.mubr.f32.gmra.mrb[0].mxu0 %v488
        %v604 = vpop.f32.mrb[0].mxu0
        %v605 = vadd.f32 %v472, %v604
        %v606 = vpop.f32.mrb[0].mxu0
        %607 = vmatprep.mubr.f32.mxu0 0.0
        %608 = vmatmul.mubr.f32.gmra.mrb[0].mxu0 %v491
        %v609 = vpop.f32.mrb[0].mxu0
        %v610 = vadd.f32 %v472, %v609
        %v611 = vpop.f32.mrb[0].mxu0
        %612 = vmatprep.mubr.f32.mxu0 0.0
        %613 = vmatmul.mubr.f32.gmra.mrb[0].mxu0 %v494
        %v614 = vpop.f32.mrb[0].mxu0
        %v615 = vadd.f32 %v472, %v614
        %v616 = vpop.f32.mrb[0].mxu0
        %617 = vmatprep.mubr.f32.mxu0 0.0
        %618 = vmatmul.mubr.f32.gmra.mrb[0].mxu0 %v497
        %v619 = vpop.f32.mrb[0].mxu0
        %v620 = vadd.f32 %v472, %v619
        %v621 = vpop.f32.mrb[0].mxu0
        %622 = vmatprep.mubr.f32.mxu0 0.0
        %623 = vmatmul.mubr.f32.gmra.mrb[0].mxu0 %v500
        %v624 = vpop.f32.mrb[0].mxu0
        %v625 = vadd.f32 %v472, %v624
        %v626 = vpop.f32.mrb[0].mxu0
        %627 = vmatprep.mubr.f32.mxu0 0.0
        %628 = vmatmul.mubr.f32.gmra.mrb[0].mxu0 %v503
        %v629 = vpop.f32.mrb[0].mxu0
        %v630 = vadd.f32 %v472, %v629
        %v631 = vpop.f32.mrb[0].mxu0
        %632 = vmatprep.mubr.f32.mxu0 0.0
        %633 = vmatmul.mubr.f32.gmra.mrb[0].mxu0 %v506
        %v634 = vpop.f32.mrb[0].mxu0
        %v635 = vadd.f32 %v472, %v634
        %v636 = vpop.f32.mrb[0].mxu0
        %637 = vmatprep.mubr.f32.mxu0 0.0
        %638 = vmatmul.mubr.f32.gmra.mrb[0].mxu0 %v509
        %v639 = vpop.f32.mrb[0].mxu0
        %v640 = vadd.f32 %v472, %v639
        %v641 = vpop.f32.mrb[0].mxu0
        %642 = vmatprep.mubr.f32.mxu0 0.0
        %643 = vmatmul.mubr.f32.gmra.mrb[0].mxu0 %v512
        %v644 = vpop.f32.mrb[0].mxu0
        %v645 = vadd.f32 %v472, %v644
        %v646 = vpop.f32.mrb[0].mxu0
        %647 = vdwg.mxu0
        %v648 = vmax.f32 %v585, 0.0
        %v649 = vmax.f32 %v590, 0.0
        %v650 = vmax.f32 %v595, 0.0
        %v651 = vmax.f32 %v600, 0.0
        %v652 = vmax.f32 %v605, 0.0
        %v653 = vmax.f32 %v610, 0.0
        %v654 = vmax.f32 %v615, 0.0
        %v655 = vmax.f32 %v620, 0.0
        %v656 = vmax.f32 %v625, 0.0
        %v657 = vmax.f32 %v630, 0.0
        %v658 = vmax.f32 %v635, 0.0
        %v659 = vmax.f32 %v640, 0.0
        %v660 = vmax.f32 %v645, 0.0
        %v661 = vld [vmem:[%s3] sm:$0xff]
        %v662 = vld [vmem:[%s3 + $0x8] sm:$0xff]
        %v663 = vld [vmem:[%s3 + $0x10] sm:$0xff]
        %v664 = vld [vmem:[%s3 + $0x18] sm:$0xff]
        %v665 = vld [vmem:[%s3 + $0x20] sm:$0xff]
        %v666 = vld [vmem:[%s3 + $0x28] sm:$0xff]
        %v667 = vld [vmem:[%s3 + $0x30] sm:$0xff]
        %v668 = vld [vmem:[%s3 + $0x38] sm:$0xff]
        %v669 = vld [vmem:[%s3 + $0x40] sm:$0xff]
        %v670 = vld [vmem:[%s3 + $0x48] sm:$0xff]
        %v671 = vld [vmem:[%s3 + $0x50] sm:$0xff]
        %v672 = vld [vmem:[%s3 + $0x58] sm:$0xff]
        %v673 = vld [vmem:[%s3 + $0x60] sm:$0xff]
        %v674 = vld [vmem:[%s3 + $0x68] sm:$0xff]
        %v675 = vld [vmem:[%s3 + $0x70] sm:$0xff]
        %v676 = vld [vmem:[%s3 + $0x78] sm:$0xff]
        %v677 = vld [vmem:[%s4] sm:$0x1]
        %v679 = vlaneseq
        %v680 = vshrl.u32 %v679, 7
        %v681 = vsub.s32 0, %v680
        %v682 = vrot.slane %v677, %v681
        %684 = vmatprep.subr.mxu0 0.0
        %685 = vmatpush1.msra.mxu0 %v661
        %686 = vmatprep.subr.mxu0 0.0
        %687 = vmatpush1.msra.mxu0 %v662
        %688 = vmatprep.subr.mxu0 0.0
        %689 = vmatpush1.msra.mxu0 %v663
        %690 = vmatprep.subr.mxu0 0.0
        %691 = vmatpush1.msra.mxu0 %v664
        %692 = vmatprep.subr.mxu0 0.0
        %693 = vmatpush1.msra.mxu0 %v665
        %694 = vmatprep.subr.mxu0 0.0
        %695 = vmatpush1.msra.mxu0 %v666
        %696 = vmatprep.subr.mxu0 0.0
        %697 = vmatpush1.msra.mxu0 %v667
        %698 = vmatprep.subr.mxu0 0.0
        %699 = vmatpush1.msra.mxu0 %v668
        %700 = vmatprep.subr.mxu0 0.0
        %701 = vmatpush1.msra.mxu0 %v669
        %702 = vmatprep.subr.mxu0 0.0
        %703 = vmatpush1.msra.mxu0 %v670
        %704 = vmatprep.subr.mxu0 0.0
        %705 = vmatpush1.msra.mxu0 %v671
        %706 = vmatprep.subr.mxu0 0.0
        %707 = vmatpush1.msra.mxu0 %v672
        %708 = vmatprep.subr.mxu0 0.0
        %709 = vmatpush1.msra.mxu0 %v673
        %710 = vmatprep.subr.mxu0 0.0
        %711 = vmatpush1.msra.mxu0 %v674
        %712 = vmatprep.subr.mxu0 0.0
        %713 = vmatpush1.msra.mxu0 %v675
        %714 = vmatprep.subr.mxu0 0.0
        %715 = vmatpush1.msra.mxu0 %v676
        %716 = vmatprep.subr.mxu0 0.0
        %717 = vmatpush1.msra.mxu0 0.0
        %718 = vmatprep.subr.mxu0 0.0
        %719 = vmatpush1.msra.mxu0 0.0
        %720 = vmatprep.subr.mxu0 0.0
        %721 = vmatpush1.msra.mxu0 0.0
        %722 = vmatprep.subr.mxu0 0.0
        %723 = vmatpush1.msra.mxu0 0.0
        %724 = vmatprep.subr.mxu0 0.0
        %725 = vmatpush1.msra.mxu0 0.0
        %726 = vmatprep.subr.mxu0 0.0
        %727 = vmatpush1.msra.mxu0 0.0
        %728 = vmatprep.subr.mxu0 0.0
        %729 = vmatpush1.msra.mxu0 0.0
        %730 = vmatprep.subr.mxu0 0.0
        %731 = vmatpush1.msra.mxu0 0.0
        %732 = vmatprep.subr.mxu0 0.0
        %733 = vmatpush1.msra.mxu0 0.0
        %734 = vmatprep.subr.mxu0 0.0
        %735 = vmatpush1.msra.mxu0 0.0
        %736 = vmatprep.subr.mxu0 0.0
        %737 = vmatpush1.msra.mxu0 0.0
        %738 = vmatprep.subr.mxu0 0.0
        %739 = vmatpush1.msra.mxu0 0.0
        %740 = vmatprep.subr.mxu0 0.0
        %741 = vmatpush1.msra.mxu0 0.0
        %742 = vmatprep.subr.mxu0 0.0
        %743 = vmatpush1.msra.mxu0 0.0
        %744 = vmatprep.subr.mxu0 0.0
        %745 = vmatpush1.msra.mxu0 0.0
        %746 = vmatprep.subr.mxu0 0.0
        %747 = vmatpush1.msra.mxu0 0.0
        %748 = vmatprep.mubr.f32.mxu0 0.0
        %749 = vmatmul.mubr.f32.gmra.mrb[0].mxu0 %v648
        %v750 = vpop.f32.mrb[0].mxu0
        %v751 = vadd.f32 %v682, %v750
        %v752 = vpop.f32.mrb[0].mxu0
        %753 = vmatprep.mubr.f32.mxu0 0.0
        %754 = vmatmul.mubr.f32.gmra.mrb[0].mxu0 %v649
        %v755 = vpop.f32.mrb[0].mxu0
        %v756 = vadd.f32 %v682, %v755
        %v757 = vpop.f32.mrb[0].mxu0
        %758 = vmatprep.mubr.f32.mxu0 0.0
        %759 = vmatmul.mubr.f32.gmra.mrb[0].mxu0 %v650
        %v760 = vpop.f32.mrb[0].mxu0
        %v761 = vadd.f32 %v682, %v760
        %v762 = vpop.f32.mrb[0].mxu0
        %763 = vmatprep.mubr.f32.mxu0 0.0
        %764 = vmatmul.mubr.f32.gmra.mrb[0].mxu0 %v651
        %v765 = vpop.f32.mrb[0].mxu0
        %v766 = vadd.f32 %v682, %v765
        %v767 = vpop.f32.mrb[0].mxu0
        %768 = vmatprep.mubr.f32.mxu0 0.0
        %769 = vmatmul.mubr.f32.gmra.mrb[0].mxu0 %v652
        %v770 = vpop.f32.mrb[0].mxu0
        %v771 = vadd.f32 %v682, %v770
        %v772 = vpop.f32.mrb[0].mxu0
        %773 = vmatprep.mubr.f32.mxu0 0.0
        %774 = vmatmul.mubr.f32.gmra.mrb[0].mxu0 %v653
        %v775 = vpop.f32.mrb[0].mxu0
        %v776 = vadd.f32 %v682, %v775
        %v777 = vpop.f32.mrb[0].mxu0
        %778 = vmatprep.mubr.f32.mxu0 0.0
        %779 = vmatmul.mubr.f32.gmra.mrb[0].mxu0 %v654
        %v780 = vpop.f32.mrb[0].mxu0
        %v781 = vadd.f32 %v682, %v780
        %v782 = vpop.f32.mrb[0].mxu0
        %783 = vmatprep.mubr.f32.mxu0 0.0
        %784 = vmatmul.mubr.f32.gmra.mrb[0].mxu0 %v655
        %v785 = vpop.f32.mrb[0].mxu0
        %v786 = vadd.f32 %v682, %v785
        %v787 = vpop.f32.mrb[0].mxu0
        %788 = vmatprep.mubr.f32.mxu0 0.0
        %789 = vmatmul.mubr.f32.gmra.mrb[0].mxu0 %v656
        %v790 = vpop.f32.mrb[0].mxu0
        %v791 = vadd.f32 %v682, %v790
        %v792 = vpop.f32.mrb[0].mxu0
        %793 = vmatprep.mubr.f32.mxu0 0.0
        %794 = vmatmul.mubr.f32.gmra.mrb[0].mxu0 %v657
        %v795 = vpop.f32.mrb[0].mxu0
        %v796 = vadd.f32 %v682, %v795
        %v797 = vpop.f32.mrb[0].mxu0
        %798 = vmatprep.mubr.f32.mxu0 0.0
        %799 = vmatmul.mubr.f32.gmra.mrb[0].mxu0 %v658
        %v800 = vpop.f32.mrb[0].mxu0
        %v801 = vadd.f32 %v682, %v800
        %v802 = vpop.f32.mrb[0].mxu0
        %803 = vmatprep.mubr.f32.mxu0 0.0
        %804 = vmatmul.mubr.f32.gmra.mrb[0].mxu0 %v659
        %v805 = vpop.f32.mrb[0].mxu0
        %v806 = vadd.f32 %v682, %v805
        %v807 = vpop.f32.mrb[0].mxu0
        %808 = vmatprep.mubr.f32.mxu0 0.0
        %809 = vmatmul.mubr.f32.gmra.mrb[0].mxu0 %v660
        %v810 = vpop.f32.mrb[0].mxu0
        %v811 = vadd.f32 %v682, %v810
        %v812 = vpop.f32.mrb[0].mxu0
        %813 = vdwg.mxu0
        %v814 = vmax.f32 %v751, 0.0
        %v815 = vmax.f32 %v756, 0.0
        %v816 = vmax.f32 %v761, 0.0
        %v817 = vmax.f32 %v766, 0.0
        %v818 = vmax.f32 %v771, 0.0
        %v819 = vmax.f32 %v776, 0.0
        %v820 = vmax.f32 %v781, 0.0
        %v821 = vmax.f32 %v786, 0.0
        %v822 = vmax.f32 %v791, 0.0
        %v823 = vmax.f32 %v796, 0.0
        %v824 = vmax.f32 %v801, 0.0
        %v825 = vmax.f32 %v806, 0.0
        %v826 = vmax.f32 %v811, 0.0
        %v827 = vld [vmem:[#allocation5] sm:$0xff]
        %v828 = vld [vmem:[#allocation5 + $0x8] sm:$0xff]
        %v829 = vld [vmem:[#allocation5 + $0x10] sm:$0xff]
        %v830 = vld [vmem:[#allocation5 + $0x18] sm:$0xff]
        %v831 = vld [vmem:[#allocation5 + $0x20] sm:$0xff]
        %v832 = vld [vmem:[#allocation5 + $0x28] sm:$0xff]
        %v833 = vld [vmem:[#allocation5 + $0x30] sm:$0xff]
        %v834 = vld [vmem:[#allocation5 + $0x38] sm:$0xff]
        %v835 = vld [vmem:[#allocation5 + $0x40] sm:$0xff]
        %v836 = vld [vmem:[#allocation5 + $0x48] sm:$0xff]
        %v837 = vld [vmem:[#allocation5 + $0x50] sm:$0xff]
        %v838 = vld [vmem:[#allocation5 + $0x58] sm:$0xff]
        %v839 = vld [vmem:[#allocation5 + $0x60] sm:$0xff]
        %v840 = vld [vmem:[#allocation5 + $0x68] sm:$0xff]
        %v841 = vld [vmem:[#allocation5 + $0x70] sm:$0xff]
        %v842 = vld [vmem:[#allocation5 + $0x78] sm:$0xff]
        %v843 = vld [vmem:[#allocation7] sm:$0x1]
        %v845 = vlaneseq
        %v846 = vshrl.u32 %v845, 7
        %v847 = vsub.s32 0, %v846
        %v848 = vrot.slane %v843, %v847
        %850 = vmatprep.subr.mxu0 0.0
        %851 = vmatpush1.msra.mxu0 %v827
        %852 = vmatprep.subr.mxu0 0.0
        %853 = vmatpush1.msra.mxu0 %v828
        %854 = vmatprep.subr.mxu0 0.0
        %855 = vmatpush1.msra.mxu0 %v829
        %856 = vmatprep.subr.mxu0 0.0
        %857 = vmatpush1.msra.mxu0 %v830
        %858 = vmatprep.subr.mxu0 0.0
        %859 = vmatpush1.msra.mxu0 %v831
        %860 = vmatprep.subr.mxu0 0.0
        %861 = vmatpush1.msra.mxu0 %v832
        %862 = vmatprep.subr.mxu0 0.0
        %863 = vmatpush1.msra.mxu0 %v833
        %864 = vmatprep.subr.mxu0 0.0
        %865 = vmatpush1.msra.mxu0 %v834
        %866 = vmatprep.subr.mxu0 0.0
        %867 = vmatpush1.msra.mxu0 %v835
        %868 = vmatprep.subr.mxu0 0.0
        %869 = vmatpush1.msra.mxu0 %v836
        %870 = vmatprep.subr.mxu0 0.0
        %871 = vmatpush1.msra.mxu0 %v837
        %872 = vmatprep.subr.mxu0 0.0
        %873 = vmatpush1.msra.mxu0 %v838
        %874 = vmatprep.subr.mxu0 0.0
        %875 = vmatpush1.msra.mxu0 %v839
        %876 = vmatprep.subr.mxu0 0.0
        %877 = vmatpush1.msra.mxu0 %v840
        %878 = vmatprep.subr.mxu0 0.0
        %879 = vmatpush1.msra.mxu0 %v841
        %880 = vmatprep.subr.mxu0 0.0
        %881 = vmatpush1.msra.mxu0 %v842
        %882 = vmatprep.subr.mxu0 0.0
        %883 = vmatpush1.msra.mxu0 0.0
        %884 = vmatprep.subr.mxu0 0.0
        %885 = vmatpush1.msra.mxu0 0.0
        %886 = vmatprep.subr.mxu0 0.0
        %887 = vmatpush1.msra.mxu0 0.0
        %888 = vmatprep.subr.mxu0 0.0
        %889 = vmatpush1.msra.mxu0 0.0
        %890 = vmatprep.subr.mxu0 0.0
        %891 = vmatpush1.msra.mxu0 0.0
        %892 = vmatprep.subr.mxu0 0.0
        %893 = vmatpush1.msra.mxu0 0.0
        %894 = vmatprep.subr.mxu0 0.0
        %895 = vmatpush1.msra.mxu0 0.0
        %896 = vmatprep.subr.mxu0 0.0
        %897 = vmatpush1.msra.mxu0 0.0
        %898 = vmatprep.subr.mxu0 0.0
        %899 = vmatpush1.msra.mxu0 0.0
        %900 = vmatprep.subr.mxu0 0.0
        %901 = vmatpush1.msra.mxu0 0.0
        %902 = vmatprep.subr.mxu0 0.0
        %903 = vmatpush1.msra.mxu0 0.0
        %904 = vmatprep.subr.mxu0 0.0
        %905 = vmatpush1.msra.mxu0 0.0
        %906 = vmatprep.subr.mxu0 0.0
        %907 = vmatpush1.msra.mxu0 0.0
        %908 = vmatprep.subr.mxu0 0.0
        %909 = vmatpush1.msra.mxu0 0.0
        %910 = vmatprep.subr.mxu0 0.0
        %911 = vmatpush1.msra.mxu0 0.0
        %912 = vmatprep.subr.mxu0 0.0
        %913 = vmatpush1.msra.mxu0 0.0
        %914 = vmatprep.mubr.f32.mxu0 0.0
        %915 = vmatmul.mubr.f32.gmra.mrb[0].mxu0 %v814
        %v916 = vpop.f32.mrb[0].mxu0
        %v917 = vadd.f32 %v848, %v916
        %v918 = vpop.f32.mrb[0].mxu0
        %919 = vmatprep.mubr.f32.mxu0 0.0
        %920 = vmatmul.mubr.f32.gmra.mrb[0].mxu0 %v815
        %v921 = vpop.f32.mrb[0].mxu0
        %v922 = vadd.f32 %v848, %v921
        %v923 = vpop.f32.mrb[0].mxu0
        %924 = vmatprep.mubr.f32.mxu0 0.0
        %925 = vmatmul.mubr.f32.gmra.mrb[0].mxu0 %v816
        %v926 = vpop.f32.mrb[0].mxu0
        %v927 = vadd.f32 %v848, %v926
        %v928 = vpop.f32.mrb[0].mxu0
        %929 = vmatprep.mubr.f32.mxu0 0.0
        %930 = vmatmul.mubr.f32.gmra.mrb[0].mxu0 %v817
        %v931 = vpop.f32.mrb[0].mxu0
        %v932 = vadd.f32 %v848, %v931
        %v933 = vpop.f32.mrb[0].mxu0
        %934 = vmatprep.mubr.f32.mxu0 0.0
        %935 = vmatmul.mubr.f32.gmra.mrb[0].mxu0 %v818
        %v936 = vpop.f32.mrb[0].mxu0
        %v937 = vadd.f32 %v848, %v936
        %v938 = vpop.f32.mrb[0].mxu0
        %939 = vmatprep.mubr.f32.mxu0 0.0
        %940 = vmatmul.mubr.f32.gmra.mrb[0].mxu0 %v819
        %v941 = vpop.f32.mrb[0].mxu0
        %v942 = vadd.f32 %v848, %v941
        %v943 = vpop.f32.mrb[0].mxu0
        %944 = vmatprep.mubr.f32.mxu0 0.0
        %945 = vmatmul.mubr.f32.gmra.mrb[0].mxu0 %v820
        %v946 = vpop.f32.mrb[0].mxu0
        %v947 = vadd.f32 %v848, %v946
        %v948 = vpop.f32.mrb[0].mxu0
        %949 = vmatprep.mubr.f32.mxu0 0.0
        %950 = vmatmul.mubr.f32.gmra.mrb[0].mxu0 %v821
        %v951 = vpop.f32.mrb[0].mxu0
        %v952 = vadd.f32 %v848, %v951
        %v953 = vpop.f32.mrb[0].mxu0
        %954 = vmatprep.mubr.f32.mxu0 0.0
        %955 = vmatmul.mubr.f32.gmra.mrb[0].mxu0 %v822
        %v956 = vpop.f32.mrb[0].mxu0
        %v957 = vadd.f32 %v848, %v956
        %v958 = vpop.f32.mrb[0].mxu0
        %959 = vmatprep.mubr.f32.mxu0 0.0
        %960 = vmatmul.mubr.f32.gmra.mrb[0].mxu0 %v823
        %v961 = vpop.f32.mrb[0].mxu0
        %v962 = vadd.f32 %v848, %v961
        %v963 = vpop.f32.mrb[0].mxu0
        %964 = vmatprep.mubr.f32.mxu0 0.0
        %965 = vmatmul.mubr.f32.gmra.mrb[0].mxu0 %v824
        %v966 = vpop.f32.mrb[0].mxu0
        %v967 = vadd.f32 %v848, %v966
        %v968 = vpop.f32.mrb[0].mxu0
        %969 = vmatprep.mubr.f32.mxu0 0.0
        %970 = vmatmul.mubr.f32.gmra.mrb[0].mxu0 %v825
        %v971 = vpop.f32.mrb[0].mxu0
        %v972 = vadd.f32 %v848, %v971
        %v973 = vpop.f32.mrb[0].mxu0
        %974 = vmatprep.mubr.f32.mxu0 0.0
        %975 = vmatmul.mubr.f32.gmra.mrb[0].mxu0 %v826
        %v976 = vpop.f32.mrb[0].mxu0
        %v977 = vadd.f32 %v848, %v976
        %v978 = vpop.f32.mrb[0].mxu0
        %979 = vdwg.mxu0
        %v980 = vmax.f32 %v917, 0.0
        %v981 = vmax.f32 %v922, 0.0
        %v982 = vmax.f32 %v927, 0.0
        %v983 = vmax.f32 %v932, 0.0
        %v984 = vmax.f32 %v937, 0.0
        %v985 = vmax.f32 %v942, 0.0
        %v986 = vmax.f32 %v947, 0.0
        %v987 = vmax.f32 %v952, 0.0
        %v988 = vmax.f32 %v957, 0.0
        %v989 = vmax.f32 %v962, 0.0
        %v990 = vmax.f32 %v967, 0.0
        %v991 = vmax.f32 %v972, 0.0
        %v992 = vmax.f32 %v977, 0.0
        %v993 = vld [vmem:[%s7] sm:$0xff]
        %v994 = vld [vmem:[%s7 + $0x8] sm:$0xff]
        %v995 = vld [vmem:[%s7 + $0x10] sm:$0xff]
        %v996 = vld [vmem:[%s7 + $0x18] sm:$0xff]
        %v997 = vld [vmem:[%s7 + $0x20] sm:$0xff]
        %v998 = vld [vmem:[%s7 + $0x28] sm:$0xff]
        %v999 = vld [vmem:[%s7 + $0x30] sm:$0xff]
        %v1000 = vld [vmem:[%s7 + $0x38] sm:$0xff]
        %v1001 = vld [vmem:[%s7 + $0x40] sm:$0xff]
        %v1002 = vld [vmem:[%s7 + $0x48] sm:$0xff]
        %v1003 = vld [vmem:[%s7 + $0x50] sm:$0xff]
        %v1004 = vld [vmem:[%s7 + $0x58] sm:$0xff]
        %v1005 = vld [vmem:[%s7 + $0x60] sm:$0xff]
        %v1006 = vld [vmem:[%s7 + $0x68] sm:$0xff]
        %v1007 = vld [vmem:[%s7 + $0x70] sm:$0xff]
        %v1008 = vld [vmem:[%s7 + $0x78] sm:$0xff]
        %v1009 = vld [vmem:[%s8] sm:$0x1]
        %v1011 = vlaneseq
        %v1012 = vshrl.u32 %v1011, 7
        %v1013 = vsub.s32 0, %v1012
        %v1014 = vrot.slane %v1009, %v1013
        %1016 = vmatprep.subr.mxu0 0.0
        %1017 = vmatpush1.msra.mxu0 %v993
        %1018 = vmatprep.subr.mxu0 0.0
        %1019 = vmatpush1.msra.mxu0 %v994
        %1020 = vmatprep.subr.mxu0 0.0
        %1021 = vmatpush1.msra.mxu0 %v995
        %1022 = vmatprep.subr.mxu0 0.0
        %1023 = vmatpush1.msra.mxu0 %v996
        %1024 = vmatprep.subr.mxu0 0.0
        %1025 = vmatpush1.msra.mxu0 %v997
        %1026 = vmatprep.subr.mxu0 0.0
        %1027 = vmatpush1.msra.mxu0 %v998
        %1028 = vmatprep.subr.mxu0 0.0
        %1029 = vmatpush1.msra.mxu0 %v999
        %1030 = vmatprep.subr.mxu0 0.0
        %1031 = vmatpush1.msra.mxu0 %v1000
        %1032 = vmatprep.subr.mxu0 0.0
        %1033 = vmatpush1.msra.mxu0 %v1001
        %1034 = vmatprep.subr.mxu0 0.0
        %1035 = vmatpush1.msra.mxu0 %v1002
        %1036 = vmatprep.subr.mxu0 0.0
        %1037 = vmatpush1.msra.mxu0 %v1003
        %1038 = vmatprep.subr.mxu0 0.0
        %1039 = vmatpush1.msra.mxu0 %v1004
        %1040 = vmatprep.subr.mxu0 0.0
        %1041 = vmatpush1.msra.mxu0 %v1005
        %1042 = vmatprep.subr.mxu0 0.0
        %1043 = vmatpush1.msra.mxu0 %v1006
        %1044 = vmatprep.subr.mxu0 0.0
        %1045 = vmatpush1.msra.mxu0 %v1007
        %1046 = vmatprep.subr.mxu0 0.0
        %1047 = vmatpush1.msra.mxu0 %v1008
        %1048 = vmatprep.subr.mxu0 0.0
        %1049 = vmatpush1.msra.mxu0 0.0
        %1050 = vmatprep.subr.mxu0 0.0
        %1051 = vmatpush1.msra.mxu0 0.0
        %1052 = vmatprep.subr.mxu0 0.0
        %1053 = vmatpush1.msra.mxu0 0.0
        %1054 = vmatprep.subr.mxu0 0.0
        %1055 = vmatpush1.msra.mxu0 0.0
        %1056 = vmatprep.subr.mxu0 0.0
        %1057 = vmatpush1.msra.mxu0 0.0
        %1058 = vmatprep.subr.mxu0 0.0
        %1059 = vmatpush1.msra.mxu0 0.0
        %1060 = vmatprep.subr.mxu0 0.0
        %1061 = vmatpush1.msra.mxu0 0.0
        %1062 = vmatprep.subr.mxu0 0.0
        %1063 = vmatpush1.msra.mxu0 0.0
        %1064 = vmatprep.subr.mxu0 0.0
        %1065 = vmatpush1.msra.mxu0 0.0
        %1066 = vmatprep.subr.mxu0 0.0
        %1067 = vmatpush1.msra.mxu0 0.0
        %1068 = vmatprep.subr.mxu0 0.0
        %1069 = vmatpush1.msra.mxu0 0.0
        %1070 = vmatprep.subr.mxu0 0.0
        %1071 = vmatpush1.msra.mxu0 0.0
        %1072 = vmatprep.subr.mxu0 0.0
        %1073 = vmatpush1.msra.mxu0 0.0
        %1074 = vmatprep.subr.mxu0 0.0
        %1075 = vmatpush1.msra.mxu0 0.0
        %1076 = vmatprep.subr.mxu0 0.0
        %1077 = vmatpush1.msra.mxu0 0.0
        %1078 = vmatprep.subr.mxu0 0.0
        %1079 = vmatpush1.msra.mxu0 0.0
        %1080 = vmatprep.mubr.f32.mxu0 0.0
        %1081 = vmatmul.mubr.f32.gmra.mrb[0].mxu0 %v980
        %v1082 = vpop.f32.mrb[0].mxu0
        %v1083 = vadd.f32 %v1014, %v1082
        %v1084 = vpop.f32.mrb[0].mxu0
        %1085 = vmatprep.mubr.f32.mxu0 0.0
        %1086 = vmatmul.mubr.f32.gmra.mrb[0].mxu0 %v981
        %v1087 = vpop.f32.mrb[0].mxu0
        %v1088 = vadd.f32 %v1014, %v1087
        %v1089 = vpop.f32.mrb[0].mxu0
        %1090 = vmatprep.mubr.f32.mxu0 0.0
        %1091 = vmatmul.mubr.f32.gmra.mrb[0].mxu0 %v982
        %v1092 = vpop.f32.mrb[0].mxu0
        %v1093 = vadd.f32 %v1014, %v1092
        %v1094 = vpop.f32.mrb[0].mxu0
        %1095 = vmatprep.mubr.f32.mxu0 0.0
        %1096 = vmatmul.mubr.f32.gmra.mrb[0].mxu0 %v983
        %v1097 = vpop.f32.mrb[0].mxu0
        %v1098 = vadd.f32 %v1014, %v1097
        %v1099 = vpop.f32.mrb[0].mxu0
        %1100 = vmatprep.mubr.f32.mxu0 0.0
        %1101 = vmatmul.mubr.f32.gmra.mrb[0].mxu0 %v984
        %v1102 = vpop.f32.mrb[0].mxu0
        %v1103 = vadd.f32 %v1014, %v1102
        %v1104 = vpop.f32.mrb[0].mxu0
        %1105 = vmatprep.mubr.f32.mxu0 0.0
        %1106 = vmatmul.mubr.f32.gmra.mrb[0].mxu0 %v985
        %v1107 = vpop.f32.mrb[0].mxu0
        %v1108 = vadd.f32 %v1014, %v1107
        %v1109 = vpop.f32.mrb[0].mxu0
        %1110 = vmatprep.mubr.f32.mxu0 0.0
        %1111 = vmatmul.mubr.f32.gmra.mrb[0].mxu0 %v986
        %v1112 = vpop.f32.mrb[0].mxu0
        %v1113 = vadd.f32 %v1014, %v1112
        %v1114 = vpop.f32.mrb[0].mxu0
        %1115 = vmatprep.mubr.f32.mxu0 0.0
        %1116 = vmatmul.mubr.f32.gmra.mrb[0].mxu0 %v987
        %v1117 = vpop.f32.mrb[0].mxu0
        %v1118 = vadd.f32 %v1014, %v1117
        %v1119 = vpop.f32.mrb[0].mxu0
        %1120 = vmatprep.mubr.f32.mxu0 0.0
        %1121 = vmatmul.mubr.f32.gmra.mrb[0].mxu0 %v988
        %v1122 = vpop.f32.mrb[0].mxu0
        %v1123 = vadd.f32 %v1014, %v1122
        %v1124 = vpop.f32.mrb[0].mxu0
        %1125 = vmatprep.mubr.f32.mxu0 0.0
        %1126 = vmatmul.mubr.f32.gmra.mrb[0].mxu0 %v989
        %v1127 = vpop.f32.mrb[0].mxu0
        %v1128 = vadd.f32 %v1014, %v1127
        %v1129 = vpop.f32.mrb[0].mxu0
        %1130 = vmatprep.mubr.f32.mxu0 0.0
        %1131 = vmatmul.mubr.f32.gmra.mrb[0].mxu0 %v990
        %v1132 = vpop.f32.mrb[0].mxu0
        %v1133 = vadd.f32 %v1014, %v1132
        %v1134 = vpop.f32.mrb[0].mxu0
        %1135 = vmatprep.mubr.f32.mxu0 0.0
        %1136 = vmatmul.mubr.f32.gmra.mrb[0].mxu0 %v991
        %v1137 = vpop.f32.mrb[0].mxu0
        %v1138 = vadd.f32 %v1014, %v1137
        %v1139 = vpop.f32.mrb[0].mxu0
        %1140 = vmatprep.mubr.f32.mxu0 0.0
        %1141 = vmatmul.mubr.f32.gmra.mrb[0].mxu0 %v992
        %v1142 = vpop.f32.mrb[0].mxu0
        %v1143 = vadd.f32 %v1014, %v1142
        %v1144 = vpop.f32.mrb[0].mxu0
        %1145 = vdwg.mxu0
        %v1146 = vmax.f32 %v1083, 0.0
        %v1147 = vmax.f32 %v1088, 0.0
        %v1148 = vmax.f32 %v1093, 0.0
        %v1149 = vmax.f32 %v1098, 0.0
        %v1150 = vmax.f32 %v1103, 0.0
        %v1151 = vmax.f32 %v1108, 0.0
        %v1152 = vmax.f32 %v1113, 0.0
        %v1153 = vmax.f32 %v1118, 0.0
        %v1154 = vmax.f32 %v1123, 0.0
        %v1155 = vmax.f32 %v1128, 0.0
        %v1156 = vmax.f32 %v1133, 0.0
        %v1157 = vmax.f32 %v1138, 0.0
        %v1158 = vmax.f32 %v1143, 0.0
        %v1159 = vld [vmem:[%s9] sm:$0x1]
        %v1161 = vlaneseq
        %v1162 = vshrl.u32 %v1161, 7
        %v1163 = vsub.s32 0, %v1162
        %v1164 = vrot.slane %v1159, %v1163
        %v1166 = vmul.f32 %v1146, %v1164
        %v1167 = vmul.f32 %v1147, %v1164
        %v1168 = vmul.f32 %v1148, %v1164
        %v1169 = vmul.f32 %v1149, %v1164
        %v1170 = vmul.f32 %v1150, %v1164
        %v1171 = vmul.f32 %v1151, %v1164
        %v1172 = vmul.f32 %v1152, %v1164
        %v1173 = vmul.f32 %v1153, %v1164
        %v1174 = vmul.f32 %v1154, %v1164
        %v1175 = vmul.f32 %v1155, %v1164
        %v1176 = vmul.f32 %v1156, %v1164
        %v1177 = vmul.f32 %v1157, %v1164
        %v1178 = vmul.f32 %v1158, %v1164
        %1179 = vadd.xlane.f32.xlu0 %v1166
        %v1180 = vpop.xlane.xlu0 %1179
        %1181 = vadd.xlane.f32.xlu0 %v1167
        %v1182 = vpop.xlane.xlu0 %1181
        %1183 = vadd.xlane.f32.xlu0 %v1168
        %v1184 = vpop.xlane.xlu0 %1183
        %1185 = vadd.xlane.f32.xlu0 %v1169
        %v1186 = vpop.xlane.xlu0 %1185
        %1187 = vadd.xlane.f32.xlu0 %v1170
        %v1188 = vpop.xlane.xlu0 %1187
        %1189 = vadd.xlane.f32.xlu0 %v1171
        %v1190 = vpop.xlane.xlu0 %1189
        %1191 = vadd.xlane.f32.xlu0 %v1172
        %v1192 = vpop.xlane.xlu0 %1191
        %1193 = vadd.xlane.f32.xlu0 %v1173
        %v1194 = vpop.xlane.xlu0 %1193
        %1195 = vadd.xlane.f32.xlu0 %v1174
        %v1196 = vpop.xlane.xlu0 %1195
        %1197 = vadd.xlane.f32.xlu0 %v1175
        %v1198 = vpop.xlane.xlu0 %1197
        %1199 = vadd.xlane.f32.xlu0 %v1176
        %v1200 = vpop.xlane.xlu0 %1199
        %1201 = vadd.xlane.f32.xlu0 %v1177
        %v1202 = vpop.xlane.xlu0 %1201
        %1203 = vadd.xlane.f32.xlu0 %v1178
        %v1204 = vpop.xlane.xlu0 %1203
        %v1205 = vld [vmem:[#allocation2] sm:$0x1]
        %v1207 = vlaneseq
        %v1208 = vshrl.u32 %v1207, 7
        %v1209 = vsub.s32 0, %v1208
        %v1210 = vrot.slane %v1205, %v1209
        %v1212 = vadd.f32 %v1180, %v1210
        %v1213 = vadd.f32 %v1182, %v1210
        %v1214 = vadd.f32 %v1184, %v1210
        %v1215 = vadd.f32 %v1186, %v1210
        %v1216 = vadd.f32 %v1188, %v1210
        %v1217 = vadd.f32 %v1190, %v1210
        %v1218 = vadd.f32 %v1192, %v1210
        %v1219 = vadd.f32 %v1194, %v1210
        %v1220 = vadd.f32 %v1196, %v1210
        %v1221 = vadd.f32 %v1198, %v1210
        %v1222 = vadd.f32 %v1200, %v1210
        %v1223 = vadd.f32 %v1202, %v1210
        %v1224 = vadd.f32 %v1204, %v1210
        %vm1225 = vcmask 7168
        %1226 = vst.msk [vmem:[%s432] sm:$0xff] %vm1225, %v1212
        %1227 = vst.msk [vmem:[%s432 + $0x8] sm:$0xff] %vm1225, %v1213
        %1228 = vst.msk [vmem:[%s432 + $0x10] sm:$0xff] %vm1225, %v1214
        %1229 = vst.msk [vmem:[%s432 + $0x18] sm:$0xff] %vm1225, %v1215
        %1230 = vst.msk [vmem:[%s432 + $0x20] sm:$0xff] %vm1225, %v1216
        %1231 = vst.msk [vmem:[%s432 + $0x28] sm:$0xff] %vm1225, %v1217
        %1232 = vst.msk [vmem:[%s432 + $0x30] sm:$0xff] %vm1225, %v1218
        %1233 = vst.msk [vmem:[%s432 + $0x38] sm:$0xff] %vm1225, %v1219
        %1234 = vst.msk [vmem:[%s432 + $0x40] sm:$0xff] %vm1225, %v1220
        %1235 = vst.msk [vmem:[%s432 + $0x48] sm:$0xff] %vm1225, %v1221
        %1236 = vst.msk [vmem:[%s432 + $0x50] sm:$0xff] %vm1225, %v1222
        %1237 = vst.msk [vmem:[%s432 + $0x58] sm:$0xff] %vm1225, %v1223
        %1238 = vst.msk [vmem:[%s432 + $0x60] sm:$0xff] %vm1225, %v1224
        %s1239 = sand.u32 %s270, 1
        %s1240 = sand.u32 %s270, 1
        %s1241 = smul.addr %s1240, 104
        %s1242 = scalar_lea.vmem [#allocation8], %s1241
        // Predicated region
        $region77: #{tpu_custom_call.1} parent=63 // pred_check
          %p1243 = pneg %p280
        $region78: #{tpu_custom_call.1} parent=63 // pred_check_branch
          %1245 = sbr.rel (%p1243) target = $region80
        $region79: #{tpu_custom_call.1} parent=63 // pred_region
          %s1246 = smul.u32 13, %s26
          %s1247 = ssub.s32 25, %s1246
          %p1248 = scmp.lt.s32.totalorder %s1247, 13
          %s1249 = scalar_select %p1248, %s1247, 13
          %s1250 = smul.u32 128, %s1249
          %p1251 = scmp.ne.s32.totalorder 0, %s1250
          %s1252 = smul.addr %s1246, 8
          %s1253 = scalar_lea.vmem %s11, %s1252
          // Predicated region
          $region81: #{tpu_custom_call.1} parent=79 // pred_check
            %p1254 = pneg %p1251
          $region82: #{tpu_custom_call.1} parent=79 // pred_check_branch
            %1256 = sbr.rel (%p1254) target = $region84
          $region83: #{tpu_custom_call.1} parent=79 // pred_region
            // Predicated region
            $region85: #{tpu_custom_call.1} parent=83 // pred_check
              _
            $region86: #{tpu_custom_call.1} parent=83 // pred_check_branch
              %1258 = sbr.rel (0) target = $region88
            $region87: #{tpu_custom_call.1} parent=83 // pred_region
              // Predicated region
              $region107: #{tpu_custom_call.1} parent=87 // pred_check
                _
              $region108: #{tpu_custom_call.1} parent=87 // pred_check_branch
                %1332 = sbr.rel (0) target = $region110
              $region109: #{tpu_custom_call.1} parent=87 // pred_region
                %s1333 = sdiv.u32.pop %s1249, 13
                %s1334 = srem.u32.pop %s1249, 13
                // While loop
                $region111: #{tpu_custom_call.1} parent=109 // loop_pre_header
                  _
                $region112: #{tpu_custom_call.1} parent=109 // loop_header
                  %s1336 = sphi 0, %s1338
                  %p1337 = scmp.ge.s32.totalorder %s1336, %s1333
                  %s1341 = sphi 0, %s1372
                  %s1342 = sphi %s1242, %s1375
                  %s1343 = sphi %s1253, %s1376
                $region113: #{tpu_custom_call.1} parent=109 // loop_header_branch
                  %1340 = sbr.rel (%p1337) target = $region117
                $region114: #{tpu_custom_call.1} parent=109 // loop_body
                  %v1344 = vld [vmem:[%s1342] sm:$0xff]
                  %1345 = vst [vmem:[%s1343] sm:$0xff] %v1344
                  %v1346 = vld [vmem:[%s1342 + $0x8] sm:$0xff]
                  %1347 = vst [vmem:[%s1343 + $0x8] sm:$0xff] %v1346
                  %v1348 = vld [vmem:[%s1342 + $0x10] sm:$0xff]
                  %1349 = vst [vmem:[%s1343 + $0x10] sm:$0xff] %v1348
                  %v1350 = vld [vmem:[%s1342 + $0x18] sm:$0xff]
                  %1351 = vst [vmem:[%s1343 + $0x18] sm:$0xff] %v1350
                  %v1352 = vld [vmem:[%s1342 + $0x20] sm:$0xff]
                  %1353 = vst [vmem:[%s1343 + $0x20] sm:$0xff] %v1352
                  %v1354 = vld [vmem:[%s1342 + $0x28] sm:$0xff]
                  %1355 = vst [vmem:[%s1343 + $0x28] sm:$0xff] %v1354
                  %v1356 = vld [vmem:[%s1342 + $0x30] sm:$0xff]
                  %1357 = vst [vmem:[%s1343 + $0x30] sm:$0xff] %v1356
                  %v1358 = vld [vmem:[%s1342 + $0x38] sm:$0xff]
                  %1359 = vst [vmem:[%s1343 + $0x38] sm:$0xff] %v1358
                  %v1360 = vld [vmem:[%s1342 + $0x40] sm:$0xff]
                  %1361 = vst [vmem:[%s1343 + $0x40] sm:$0xff] %v1360
                  %v1362 = vld [vmem:[%s1342 + $0x48] sm:$0xff]
                  %1363 = vst [vmem:[%s1343 + $0x48] sm:$0xff] %v1362
                  %v1364 = vld [vmem:[%s1342 + $0x50] sm:$0xff]
                  %1365 = vst [vmem:[%s1343 + $0x50] sm:$0xff] %v1364
                  %v1366 = vld [vmem:[%s1342 + $0x58] sm:$0xff]
                  %1367 = vst [vmem:[%s1343 + $0x58] sm:$0xff] %v1366
                  %v1368 = vld [vmem:[%s1342 + $0x60] sm:$0xff]
                  %1369 = vst [vmem:[%s1343 + $0x60] sm:$0xff] %v1368
                  %s1370 = sadd.s32 1, %s1341
                  %p1371 = scmp.ge.s32.totalorder %s1370, %s1333
                  %s1372 = scalar_select %p1371, 0, %s1370
                  %s1373 = smul.u32 %s1372, 104
                  %s1374 = smul.u32 %s1372, 104
                  %s1375 = scalar_lea.vmem %s1242, %s1373 [#allocation8]
                  %s1376 = scalar_lea.vmem %s1253, %s1374
                $region115: #{tpu_custom_call.1} parent=109 // loop_footer
                  %s1338 = sadd.s32 %s1336, 1
                $region116: #{tpu_custom_call.1} parent=109 // loop_footer_branch
                  %1335 = sbr.rel target = $region112
                $region117: #{tpu_custom_call.1} parent=109 // loop_exit
                  _
                %s1377 = sdiv.u32.pop %s1249, 13
                %s1378 = srem.u32.pop %s1249, 13
                %s1379 = smul.u32 %s1377, 13
                %s1380 = smul.u32 8, %s1379
                %s1381 = scalar_lea.vmem %s1242, %s1380 [#allocation8]
                %s1382 = smul.u32 8, %s1379
                %s1383 = scalar_lea.vmem %s1253, %s1382
                // While loop
                $region118: #{tpu_custom_call.1} parent=109 // loop_pre_header
                  _
                $region119: #{tpu_custom_call.1} parent=109 // loop_header
                  %s1385 = sphi 0, %s1387
                  %p1386 = scmp.ge.s32.totalorder %s1385, %s1378
                  %s1390 = sphi 0, %s1397
                  %s1391 = sphi %s1381, %s1400
                  %s1392 = sphi %s1383, %s1401
                $region120: #{tpu_custom_call.1} parent=109 // loop_header_branch
                  %1389 = sbr.rel (%p1386) target = $region124
                $region121: #{tpu_custom_call.1} parent=109 // loop_body
                  %v1393 = vld [vmem:[%s1391] sm:$0xff]
                  %1394 = vst [vmem:[%s1392] sm:$0xff] %v1393
                  %s1395 = sadd.s32 1, %s1390
                  %p1396 = scmp.ge.s32.totalorder %s1395, %s1378
                  %s1397 = scalar_select %p1396, 0, %s1395
                  %s1398 = smul.u32 %s1397, 8
                  %s1399 = smul.u32 %s1397, 8
                  %s1400 = scalar_lea.vmem %s1381, %s1398 [#allocation8]
                  %s1401 = scalar_lea.vmem %s1383, %s1399
                $region122: #{tpu_custom_call.1} parent=109 // loop_footer
                  %s1387 = sadd.s32 %s1385, 1
                $region123: #{tpu_custom_call.1} parent=109 // loop_footer_branch
                  %1384 = sbr.rel target = $region119
                $region124: #{tpu_custom_call.1} parent=109 // loop_exit
                  _
              $region110: #{tpu_custom_call.1} parent=87 // pred_fallthru
                _
              // Predicated region
              $region125: #{tpu_custom_call.1} parent=87 // pred_check
                _
              $region126: #{tpu_custom_call.1} parent=87 // pred_check_branch
                %1403 = sbr.rel target = $region128
              $region127: #{tpu_custom_call.1} parent=87 // pred_region
                _
              $region128: #{tpu_custom_call.1} parent=87 // pred_fallthru
                _
            $region88: #{tpu_custom_call.1} parent=83 // pred_fallthru
              _
            // Predicated region
            $region89: #{tpu_custom_call.1} parent=83 // pred_check
              _
            $region90: #{tpu_custom_call.1} parent=83 // pred_check_branch
              %1260 = sbr.rel target = $region92
            $region91: #{tpu_custom_call.1} parent=83 // pred_region
              %s1262 = sdiv.u32.pop %s1249, 13
              %s1263 = srem.u32.pop %s1249, 13
              // While loop
              $region93: #{tpu_custom_call.1} parent=91 // loop_pre_header
                _
              $region94: #{tpu_custom_call.1} parent=91 // loop_header
                %s1265 = sphi 0, %s1267
                %p1266 = scmp.ge.s32.totalorder %s1265, %s1262
                %s1270 = sphi 0, %s1301
                %s1271 = sphi %s1242, %s1304
                %s1272 = sphi %s1253, %s1305
              $region95: #{tpu_custom_call.1} parent=91 // loop_header_branch
                %1269 = sbr.rel (%p1266) target = $region99
              $region96: #{tpu_custom_call.1} parent=91 // loop_body
                %v1273 = vld [vmem:[%s1271] sm:$0xff]
                %1274 = vst [vmem:[%s1272] sm:$0xff] %v1273
                %v1275 = vld [vmem:[%s1271 + $0x8] sm:$0xff]
                %1276 = vst [vmem:[%s1272 + $0x8] sm:$0xff] %v1275
                %v1277 = vld [vmem:[%s1271 + $0x10] sm:$0xff]
                %1278 = vst [vmem:[%s1272 + $0x10] sm:$0xff] %v1277
                %v1279 = vld [vmem:[%s1271 + $0x18] sm:$0xff]
                %1280 = vst [vmem:[%s1272 + $0x18] sm:$0xff] %v1279
                %v1281 = vld [vmem:[%s1271 + $0x20] sm:$0xff]
                %1282 = vst [vmem:[%s1272 + $0x20] sm:$0xff] %v1281
                %v1283 = vld [vmem:[%s1271 + $0x28] sm:$0xff]
                %1284 = vst [vmem:[%s1272 + $0x28] sm:$0xff] %v1283
                %v1285 = vld [vmem:[%s1271 + $0x30] sm:$0xff]
                %1286 = vst [vmem:[%s1272 + $0x30] sm:$0xff] %v1285
                %v1287 = vld [vmem:[%s1271 + $0x38] sm:$0xff]
                %1288 = vst [vmem:[%s1272 + $0x38] sm:$0xff] %v1287
                %v1289 = vld [vmem:[%s1271 + $0x40] sm:$0xff]
                %1290 = vst [vmem:[%s1272 + $0x40] sm:$0xff] %v1289
                %v1291 = vld [vmem:[%s1271 + $0x48] sm:$0xff]
                %1292 = vst [vmem:[%s1272 + $0x48] sm:$0xff] %v1291
                %v1293 = vld [vmem:[%s1271 + $0x50] sm:$0xff]
                %1294 = vst [vmem:[%s1272 + $0x50] sm:$0xff] %v1293
                %v1295 = vld [vmem:[%s1271 + $0x58] sm:$0xff]
                %1296 = vst [vmem:[%s1272 + $0x58] sm:$0xff] %v1295
                %v1297 = vld [vmem:[%s1271 + $0x60] sm:$0xff]
                %1298 = vst [vmem:[%s1272 + $0x60] sm:$0xff] %v1297
                %s1299 = sadd.s32 1, %s1270
                %p1300 = scmp.ge.s32.totalorder %s1299, %s1262
                %s1301 = scalar_select %p1300, 0, %s1299
                %s1302 = smul.u32 %s1301, 104
                %s1303 = smul.u32 %s1301, 104
                %s1304 = scalar_lea.vmem %s1242, %s1302 [#allocation8]
                %s1305 = scalar_lea.vmem %s1253, %s1303
              $region97: #{tpu_custom_call.1} parent=91 // loop_footer
                %s1267 = sadd.s32 %s1265, 1
              $region98: #{tpu_custom_call.1} parent=91 // loop_footer_branch
                %1264 = sbr.rel target = $region94
              $region99: #{tpu_custom_call.1} parent=91 // loop_exit
                _
              %s1306 = sdiv.u32.pop %s1249, 13
              %s1307 = srem.u32.pop %s1249, 13
              %s1308 = smul.u32 %s1306, 13
              %s1309 = smul.u32 8, %s1308
              %s1310 = scalar_lea.vmem %s1242, %s1309 [#allocation8]
              %s1311 = smul.u32 8, %s1308
              %s1312 = scalar_lea.vmem %s1253, %s1311
              // While loop
              $region100: #{tpu_custom_call.1} parent=91 // loop_pre_header
                _
              $region101: #{tpu_custom_call.1} parent=91 // loop_header
                %s1314 = sphi 0, %s1316
                %p1315 = scmp.ge.s32.totalorder %s1314, %s1307
                %s1319 = sphi 0, %s1326
                %s1320 = sphi %s1310, %s1329
                %s1321 = sphi %s1312, %s1330
              $region102: #{tpu_custom_call.1} parent=91 // loop_header_branch
                %1318 = sbr.rel (%p1315) target = $region106
              $region103: #{tpu_custom_call.1} parent=91 // loop_body
                %v1322 = vld [vmem:[%s1320] sm:$0xff]
                %1323 = vst [vmem:[%s1321] sm:$0xff] %v1322
                %s1324 = sadd.s32 1, %s1319
                %p1325 = scmp.ge.s32.totalorder %s1324, %s1307
                %s1326 = scalar_select %p1325, 0, %s1324
                %s1327 = smul.u32 %s1326, 8
                %s1328 = smul.u32 %s1326, 8
                %s1329 = scalar_lea.vmem %s1310, %s1327 [#allocation8]
                %s1330 = scalar_lea.vmem %s1312, %s1328
              $region104: #{tpu_custom_call.1} parent=91 // loop_footer
                %s1316 = sadd.s32 %s1314, 1
              $region105: #{tpu_custom_call.1} parent=91 // loop_footer_branch
                %1313 = sbr.rel target = $region101
              $region106: #{tpu_custom_call.1} parent=91 // loop_exit
                _
            $region92: #{tpu_custom_call.1} parent=83 // pred_fallthru
              _
          $region84: #{tpu_custom_call.1} parent=79 // pred_fallthru
            _
          %1404 = vnop
        $region80: #{tpu_custom_call.1} parent=63 // pred_fallthru
          _
      $region64: #{tpu_custom_call.1} parent=5 // pred_fallthru
        _
      %p1405 = scmp.le.s32.totalorder 2, %s21
      // Predicated region
      $region129: #{tpu_custom_call.1} parent=5 // pred_check
        %p1406 = pneg %p1405
      $region130: #{tpu_custom_call.1} parent=5 // pred_check_branch
        %1408 = sbr.rel (%p1406) target = $region132
      $region131: #{tpu_custom_call.1} parent=5 // pred_region
        %s1409 = ssub.s32 %s21, 2
        // Predicated region
        $region133: #{tpu_custom_call.1} parent=131 // pred_check
          %p1410 = pneg %p286
        $region134: #{tpu_custom_call.1} parent=131 // pred_check_branch
          %1412 = sbr.rel (%p1410) target = $region136
        $region135: #{tpu_custom_call.1} parent=131 // pred_region
          %s1413 = sand.u32 %s271, 1
          %s1414 = sand.u32 %s271, 1
          %s1415 = smul.addr %s1414, 104
          %s1416 = scalar_lea.vmem [#allocation8], %s1415
        $region136: #{tpu_custom_call.1} parent=131 // pred_fallthru
          _
      $region132: #{tpu_custom_call.1} parent=5 // pred_fallthru
        _
    $region6: #{tpu_custom_call.1} parent=1 // loop_footer
      %s25 = sadd.s32 1, %s21
    $region7: #{tpu_custom_call.1} parent=1 // loop_footer_branch
      %20 = sbr.rel target = $region3
    $region8: #{tpu_custom_call.1} parent=1 // loop_exit
      _
    %1417 = vsyncpa [#allocation4], 1
    %s1418 = scalar_lea.sflag [#allocation4], 1
    %1419 = vsyncpa %s1418, 1
    %1420 = vsyncpa [#allocation6], 1

</llo_original>
